<compile_context>
chip_gen: v7x
topology: tpu7x:2x2x1
jax: 0.10.0
libtpu: 0.0.40
codegen_flags: <defaults>
</compile_context>

<pallas_src>
import functools
import math

import jax
import jax.numpy as jnp
from jax.experimental import pallas as pl
from jax.experimental.pallas import tpu as pltpu


# ----------------------------------------------------------------------------
# Pallas kernel: eval-mode SampleNet forward + CFLoss._compute_loss, fused
# ----------------------------------------------------------------------------
def _fused_cf_kernel(x_ref, w0_ref, b0_ref, w1_ref, b1_ref, w2_ref, b2_ref,
                     feat_ref, loss_ref, t_ref, *, n_src, alpha, beta):
    """Refs:
       x_ref    : (T, D)  sample-net input, already tiled to T rows
       w*_ref   : (D, D)  Linear weight^T with eval-BatchNorm folded in
       b*_ref   : (1, D)  Linear bias with eval-BatchNorm folded in
       feat_ref : (2N, D) [source ; target] features (source = rows 0..N-1)
       loss_ref : (1, 1)  scalar CF loss
       t_ref    : (T, D)  generated sample points t
    alpha/beta/n_src are static Python closure constants.
    """
    # ---- SampleNet eval forward: (Linear+BN folded) -> LeakyReLU(0.2) x2, tanh last ----
    a = x_ref[...]
    a = jnp.dot(a, w0_ref[...], preferred_element_type=jnp.float32) + b0_ref[...]
    a = jnp.maximum(a, 0.2 * a)                        # LeakyReLU(0.2)
    a = jnp.dot(a, w1_ref[...], preferred_element_type=jnp.float32) + b1_ref[...]
    a = jnp.maximum(a, 0.2 * a)
    a = jnp.dot(a, w2_ref[...], preferred_element_type=jnp.float32) + b2_ref[...]
    t = jnp.tanh(a)                                    # (T, D)
    t_ref[...] = t

    # ---- F.normalize(feat, dim=1) for both domains at once (rsqrt multiply, EUP) ----
    f = feat_ref[...]                                  # (2N, D)
    sumsq = jnp.sum(f * f, axis=1, keepdims=True)      # (2N, 1)
    f = f * jax.lax.rsqrt(jnp.maximum(sumsq, 1e-24))   # == x / max(||x||, 1e-12)

    # ---- single MXU matmul, lane-dense orientation: z = f @ t^T -> (2N, T) ----
    z = jax.lax.dot_general(f, t, (((1,), (1,)), ((), ())),
                            preferred_element_type=jnp.float32)
    cz = jnp.cos(z)
    sz = jnp.sin(z)

    # Sums over the sample (N) axis along sublanes; source/target split at row n_src
    # (8-aligned for N=16). The 1/N of torch.mean is folded into the clamp + final scale.
    xr = jnp.sum(cz[:n_src, :], axis=0, keepdims=True)     # (1, T) == N * t_x_real
    xi = jnp.sum(sz[:n_src, :], axis=0, keepdims=True)     # (1, T) == N * t_x_imag
    tr = jnp.sum(cz[n_src:, :], axis=0, keepdims=True)     # target half
    ti = jnp.sum(sz[n_src:, :], axis=0, keepdims=True)

    xn = jnp.sqrt(xr * xr + xi * xi)                        # == N * t_x_norm
    tn = jnp.sqrt(tr * tr + ti * ti)                        # == N * t_target_norm

    amp = tn - xn
    loss_amp = amp * amp                                    # == N^2 * loss_amp
    loss_pha = 2.0 * (tn * xn - xr * tr - xi * ti)          # == N^2 * loss_pha
    n_sq = float(n_src) * float(n_src)
    loss_pha = jnp.maximum(loss_pha, 1e-12 * n_sq)          # clamp(min=1e-12), N^2-scaled

    per_t = jnp.sqrt(alpha * loss_amp + beta * loss_pha)    # (1, T) == N * sqrt(...)
    loss_ref[...] = jnp.mean(per_t, keepdims=True) * (1.0 / float(n_src))


def cf_loss_fused_pallas(source, target, x_small, params, bn_state,
                         alpha, beta, t_batchsize):
    """Eval-mode SampleNet + CFLoss._compute_loss(target, source, t) as one Pallas call.

    alpha/beta must be static Python floats here (they are baked into the kernel);
    revert to an SMEM operand if they ever become traced values.
    """
    n, d = source.shape
    reps = t_batchsize // x_small.shape[0]
    # Eval-mode forward is row-wise, so tiling the input == `.repeat(...)` on the output.
    x_tiled = jnp.tile(x_small.astype(jnp.float32), (reps, 1))            # (T, D)
    feat_cat = jnp.concatenate([source.astype(jnp.float32),
                                target.astype(jnp.float32)], axis=0)      # (2N, D)

    # Fold eval-mode BatchNorm1d into each Linear (pure parameter plumbing in the wrapper).
    eps = 1e-5
    ws, bs = [], []
    for i in range(3):
        scale = params[f"gamma{i}"] / jnp.sqrt(bn_state[f"rv{i}"] + eps)
        w_eff = (params[f"W{i}"] * scale[:, None]).T                      # (D_in, D_out)
        b_eff = scale * (params[f"b{i}"] - bn_state[f"rm{i}"]) + params[f"beta{i}"]
        ws.append(w_eff.astype(jnp.float32))
        bs.append(b_eff.reshape(1, d).astype(jnp.float32))

    kernel = functools.partial(_fused_cf_kernel, n_src=n,
                               alpha=float(alpha), beta=float(beta))
    vmem = pltpu.MemorySpace.VMEM
    loss, t_final = pl.pallas_call(
        kernel,
        out_shape=(jax.ShapeDtypeStruct((1, 1), jnp.float32),
                   jax.ShapeDtypeStruct((t_batchsize, d), jnp.float32)),
        in_specs=[pl.BlockSpec(memory_space=vmem) for _ in range(8)],
        out_specs=(pl.BlockSpec(memory_space=vmem),
                   pl.BlockSpec(memory_space=vmem)),
    )(x_tiled, ws[0], bs[0], ws[1], bs[1], ws[2], bs[2], feat_cat)
    return loss[0, 0], t_final


# ----------------------------------------------------------------------------
# Pure-JAX reference of the CF loss (adversarial grad step + sanity check)
# ----------------------------------------------------------------------------
def cf_loss_ref(feat_tg, feat, t, alpha, beta):
    def l2n(x):
        return x / jnp.maximum(jnp.sqrt(jnp.sum(x * x, axis=1, keepdims=True)), 1e-12)

    feat = l2n(feat)
    feat_tg = l2n(feat_tg)
    z_x = t @ feat.T
    z_tg = t @ feat_tg.T
    xr = jnp.mean(jnp.cos(z_x), axis=1)
    xi = jnp.mean(jnp.sin(z_x), axis=1)
    tr = jnp.mean(jnp.cos(z_tg), axis=1)
    ti = jnp.mean(jnp.sin(z_tg), axis=1)
    xn = jnp.sqrt(xr * xr + xi * xi)
    tn = jnp.sqrt(tr * tr + ti * ti)
    amp = tn - xn
    loss_amp = amp * amp
    loss_pha = jnp.maximum(2.0 * (tn * xn - xr * tr - xi * ti), 1e-12)
    return jnp.mean(jnp.sqrt(alpha * loss_amp + beta * loss_pha))


# ----------------------------------------------------------------------------
# SampleNet (plain-JAX glue): Linear -> BatchNorm1d -> LeakyReLU/Tanh, x3, then repeat
# ----------------------------------------------------------------------------
def init_sample_net(key, feature_dim):
    params = {}
    for i in range(3):
        key, k_w, k_b = jax.random.split(key, 3)
        bound = 1.0 / math.sqrt(feature_dim)
        params[f"W{i}"] = jax.random.uniform(k_w, (feature_dim, feature_dim),
                                             jnp.float32, -bound, bound)
        params[f"b{i}"] = jax.random.uniform(k_b, (feature_dim,),
                                             jnp.float32, -bound, bound)
        params[f"gamma{i}"] = jnp.ones((feature_dim,), jnp.float32)
        params[f"beta{i}"] = jnp.zeros((feature_dim,), jnp.float32)
    bn_state = {}
    for i in range(3):
        bn_state[f"rm{i}"] = jnp.zeros((feature_dim,), jnp.float32)
        bn_state[f"rv{i}"] = jnp.ones((feature_dim,), jnp.float32)
    return params, bn_state


def sample_net_forward(params, bn_state, x, training, t_batchsize):
    a = x
    n = x.shape[0]
    new_bn = dict(bn_state)
    eps, momentum = 1e-5, 0.1
    for i in range(3):
        a = a @ params[f"W{i}"].T + params[f"b{i}"]
        if training:
            mean = jnp.mean(a, axis=0)
            var = jnp.mean((a - mean) ** 2, axis=0)          # biased (normalization)
            unbiased = var * n / max(n - 1, 1)                # unbiased (running stats)
            new_bn[f"rm{i}"] = (1 - momentum) * bn_state[f"rm{i}"] + momentum * mean
            new_bn[f"rv{i}"] = (1 - momentum) * bn_state[f"rv{i}"] + momentum * unbiased
        else:
            mean = bn_state[f"rm{i}"]
            var = bn_state[f"rv{i}"]
        a = (a - mean) / jnp.sqrt(var + eps)
        a = a * params[f"gamma{i}"] + params[f"beta{i}"]
        if i < 2:
            a = jnp.where(a >= 0, a, 0.2 * a)                 # LeakyReLU(0.2)
        else:
            a = jnp.tanh(a)
    a = jnp.tile(a, (t_batchsize // n, 1))                    # .repeat(t_batchsize//k, 1)
    return a, new_bn


def adamw_step(p, g, lr=0.01, wd=0.0005, b1=0.9, b2=0.999, eps=1e-8):
    # single (first) AdamW step, zero-initialized moments
    p = p * (1.0 - lr * wd)
    m_hat = g                   # ((1-b1)*g) / (1-b1)
    v_hat = g * g               # ((1-b2)*g*g) / (1-b2)
    return p - lr * m_hat / (jnp.sqrt(v_hat) + eps)


# ----------------------------------------------------------------------------
# CFLoss.forward
# ----------------------------------------------------------------------------
def cf_loss_forward(source, target, params, bn_state, key,
                    alpha=0.5, beta=0.5, t_batchsize=64, t_var=1.0):
    feature_dim = source.shape[1]
    t_sigma_num = t_batchsize // 16
    key, k1, k2 = jax.random.split(key, 3)

    # --- train_sample_net: one adversarial AdamW step ---
    # TODO(synk): backward + AdamW have no Pallas forward-kernel equivalent; done in plain JAX.
    x1 = jax.random.normal(k1, (t_sigma_num, feature_dim), jnp.float32) * (t_var ** 0.5)

    def adv_loss(p):
        t_adv, _ = sample_net_forward(p, bn_state, x1, True, t_batchsize)
        return -cf_loss_ref(target, source, t_adv, alpha, beta)

    grads = jax.grad(adv_loss)(params)
    _, bn_state = sample_net_forward(params, bn_state, x1, True, t_batchsize)  # BN stats update
    params = {k: adamw_step(params[k], grads[k]) for k in params}

    # --- eval-mode sample generation + final CF loss, fused in ONE Pallas kernel ---
    x2 = jax.random.normal(k2, (t_sigma_num, feature_dim), jnp.float32) * (t_var ** 0.5)
    loss, t_final = cf_loss_fused_pallas(source, target, x2, params, bn_state,
                                         alpha, beta, t_batchsize)
    aux = {"params": params, "bn_state": bn_state, "x2": x2}
    return loss, t_final, aux


if __name__ == "__main__":
    # Small shapes consistent with the module: features (batch, feature_dim), t (t_batchsize, feature_dim)
    batch, feature_dim, t_batchsize = 16, 128, 64

    root = jax.random.PRNGKey(0)
    k_src, k_tgt, k_net, k_fwd = jax.random.split(root, 4)

    source = jax.random.normal(k_src, (batch, feature_dim), jnp.float32)
    target = jax.random.normal(k_tgt, (batch, feature_dim), jnp.float32) + 0.5

    params, bn_state = init_sample_net(k_net, feature_dim)

    loss, t_final, aux = cf_loss_forward(source, target, params, bn_state, k_fwd,
                                         alpha=0.5, beta=0.5, t_batchsize=t_batchsize)
    loss = jax.block_until_ready(loss)
    t_final = jax.block_until_ready(t_final)

    # sanity check 1: in-kernel SampleNet eval forward (BN folded) vs plain-JAX eval forward
    t_check, _ = sample_net_forward(aux["params"], aux["bn_state"], aux["x2"],
                                    False, t_batchsize)
    assert float(jnp.max(jnp.abs(t_final - t_check))) < 5e-3, "t_final mismatch"

    # sanity check 2: in-kernel CF loss vs pure-JAX reference on the kernel's own t
    ref = jax.block_until_ready(cf_loss_ref(target, source, t_final, 0.5, 0.5))
    assert jnp.isfinite(loss), "CF loss is not finite"
    assert abs(float(loss) - float(ref)) < 1e-3, (float(loss), float(ref))

    print("KERNEL_OK")
</pallas_src>

<mosaic_0001>
module attributes {stable_mosaic.version = 11 : i64} {
  func.func @_fused_cf_kernel(%arg0: memref<64x128xf32, #tpu.memory_space<vmem>>, %arg1: memref<128x128xf32, #tpu.memory_space<vmem>>, %arg2: memref<1x128xf32, #tpu.memory_space<vmem>>, %arg3: memref<128x128xf32, #tpu.memory_space<vmem>>, %arg4: memref<1x128xf32, #tpu.memory_space<vmem>>, %arg5: memref<128x128xf32, #tpu.memory_space<vmem>>, %arg6: memref<1x128xf32, #tpu.memory_space<vmem>>, %arg7: memref<32x128xf32, #tpu.memory_space<vmem>>, %arg8: memref<1x1xf32, #tpu.memory_space<vmem>>, %arg9: memref<64x128xf32, #tpu.memory_space<vmem>>) attributes {dimension_semantics = [], scalar_prefetch = 0 : i64, scratch_operands = 0 : i64, tpu.core_type = #tpu.core_type<tc>} {
    %c0 = arith.constant 0 : index
    %c0_0 = arith.constant 0 : index
    %0 = vector.load %arg0[%c0, %c0_0] : memref<64x128xf32, #tpu.memory_space<vmem>>, vector<64x128xf32>
    %c0_1 = arith.constant 0 : index
    %c0_2 = arith.constant 0 : index
    %1 = vector.load %arg1[%c0_1, %c0_2] : memref<128x128xf32, #tpu.memory_space<vmem>>, vector<128x128xf32>
    %cst = arith.constant dense<0.000000e+00> : vector<64x128xf32>
    %2 = tpu.matmul %0, %1, %cst {dimension_numbers = #tpu.dot_dimension_numbers<[1], [0], [0], [1], [0, 0, 1, 1], [], []>} : vector<64x128xf32>, vector<128x128xf32>, vector<64x128xf32> -> vector<64x128xf32>
    %c0_3 = arith.constant 0 : index
    %c0_4 = arith.constant 0 : index
    %3 = vector.load %arg2[%c0_3, %c0_4] : memref<1x128xf32, #tpu.memory_space<vmem>>, vector<1x128xf32>
    %4 = vector.broadcast %3 : vector<1x128xf32> to vector<64x128xf32>
    %5 = arith.addf %2, %4 : vector<64x128xf32>
    %cst_5 = arith.constant 2.000000e-01 : f32
    %6 = vector.broadcast %cst_5 : f32 to vector<64x128xf32>
    %7 = arith.mulf %6, %5 : vector<64x128xf32>
    %8 = arith.maximumf %5, %7 : vector<64x128xf32>
    %c0_6 = arith.constant 0 : index
    %c0_7 = arith.constant 0 : index
    %9 = vector.load %arg3[%c0_6, %c0_7] : memref<128x128xf32, #tpu.memory_space<vmem>>, vector<128x128xf32>
    %cst_8 = arith.constant dense<0.000000e+00> : vector<64x128xf32>
    %10 = tpu.matmul %8, %9, %cst_8 {dimension_numbers = #tpu.dot_dimension_numbers<[1], [0], [0], [1], [0, 0, 1, 1], [], []>} : vector<64x128xf32>, vector<128x128xf32>, vector<64x128xf32> -> vector<64x128xf32>
    %c0_9 = arith.constant 0 : index
    %c0_10 = arith.constant 0 : index
    %11 = vector.load %arg4[%c0_9, %c0_10] : memref<1x128xf32, #tpu.memory_space<vmem>>, vector<1x128xf32>
    %12 = vector.broadcast %11 : vector<1x128xf32> to vector<64x128xf32>
    %13 = arith.addf %10, %12 : vector<64x128xf32>
    %cst_11 = arith.constant 2.000000e-01 : f32
    %14 = vector.broadcast %cst_11 : f32 to vector<64x128xf32>
    %15 = arith.mulf %14, %13 : vector<64x128xf32>
    %16 = arith.maximumf %13, %15 : vector<64x128xf32>
    %c0_12 = arith.constant 0 : index
    %c0_13 = arith.constant 0 : index
    %17 = vector.load %arg5[%c0_12, %c0_13] : memref<128x128xf32, #tpu.memory_space<vmem>>, vector<128x128xf32>
    %cst_14 = arith.constant dense<0.000000e+00> : vector<64x128xf32>
    %18 = tpu.matmul %16, %17, %cst_14 {dimension_numbers = #tpu.dot_dimension_numbers<[1], [0], [0], [1], [0, 0, 1, 1], [], []>} : vector<64x128xf32>, vector<128x128xf32>, vector<64x128xf32> -> vector<64x128xf32>
    %c0_15 = arith.constant 0 : index
    %c0_16 = arith.constant 0 : index
    %19 = vector.load %arg6[%c0_15, %c0_16] : memref<1x128xf32, #tpu.memory_space<vmem>>, vector<1x128xf32>
    %20 = vector.broadcast %19 : vector<1x128xf32> to vector<64x128xf32>
    %21 = arith.addf %18, %20 : vector<64x128xf32>
    %22 = math.tanh %21 : vector<64x128xf32>
    %c0_17 = arith.constant 0 : index
    %c0_18 = arith.constant 0 : index
    %23 = vector.load %arg9[%c0_17, %c0_18] : memref<64x128xf32, #tpu.memory_space<vmem>>, vector<64x128xf32>
    tpu.vector_store %arg9[%c0_17, %c0_18], %22 {strides = array<i32>} : memref<64x128xf32, #tpu.memory_space<vmem>>, vector<64x128xf32>,
    %c0_19 = arith.constant 0 : index
    %c0_20 = arith.constant 0 : index
    %24 = vector.load %arg7[%c0_19, %c0_20] : memref<32x128xf32, #tpu.memory_space<vmem>>, vector<32x128xf32>
    %25 = arith.mulf %24, %24 : vector<32x128xf32>
    %cst_21 = arith.constant dense<0.000000e+00> : vector<32xf32>
    %26 = vector.multi_reduction <add>, %25, %cst_21 [1] : vector<32x128xf32> to vector<32xf32>
    %27 = vector.shape_cast %26 : vector<32xf32> to vector<32x1xf32>
    %cst_22 = arith.constant 1.000000e-24 : f32
    %28 = vector.broadcast %cst_22 : f32 to vector<32x1xf32>
    %29 = arith.maximumf %27, %28 : vector<32x1xf32>
    %30 = math.rsqrt %29 : vector<32x1xf32>
    %31 = vector.broadcast %30 : vector<32x1xf32> to vector<32x128xf32>
    %32 = arith.mulf %24, %31 : vector<32x128xf32>
    %cst_23 = arith.constant dense<0.000000e+00> : vector<32x64xf32>
    %33 = tpu.matmul %32, %22, %cst_23 {dimension_numbers = #tpu.dot_dimension_numbers<[1], [1], [0], [0], [0, 0, 1, 0], [], []>} : vector<32x128xf32>, vector<64x128xf32>, vector<32x64xf32> -> vector<32x64xf32>
    %34 = math.cos %33 : vector<32x64xf32>
    %35 = math.sin %33 : vector<32x64xf32>
    %36 = vector.extract_strided_slice %34 {offsets = [0, 0], sizes = [16, 64], strides = [1, 1]} : vector<32x64xf32> to vector<16x64xf32>
    %cst_24 = arith.constant dense<0.000000e+00> : vector<64xf32>
    %37 = vector.multi_reduction <add>, %36, %cst_24 [0] : vector<16x64xf32> to vector<64xf32>
    %38 = vector.shape_cast %37 : vector<64xf32> to vector<1x64xf32>
    %39 = vector.extract_strided_slice %35 {offsets = [0, 0], sizes = [16, 64], strides = [1, 1]} : vector<32x64xf32> to vector<16x64xf32>
    %cst_25 = arith.constant dense<0.000000e+00> : vector<64xf32>
    %40 = vector.multi_reduction <add>, %39, %cst_25 [0] : vector<16x64xf32> to vector<64xf32>
    %41 = vector.shape_cast %40 : vector<64xf32> to vector<1x64xf32>
    %42 = vector.extract_strided_slice %34 {offsets = [16, 0], sizes = [16, 64], strides = [1, 1]} : vector<32x64xf32> to vector<16x64xf32>
    %cst_26 = arith.constant dense<0.000000e+00> : vector<64xf32>
    %43 = vector.multi_reduction <add>, %42, %cst_26 [0] : vector<16x64xf32> to vector<64xf32>
    %44 = vector.shape_cast %43 : vector<64xf32> to vector<1x64xf32>
    %45 = vector.extract_strided_slice %35 {offsets = [16, 0], sizes = [16, 64], strides = [1, 1]} : vector<32x64xf32> to vector<16x64xf32>
    %cst_27 = arith.constant dense<0.000000e+00> : vector<64xf32>
    %46 = vector.multi_reduction <add>, %45, %cst_27 [0] : vector<16x64xf32> to vector<64xf32>
    %47 = vector.shape_cast %46 : vector<64xf32> to vector<1x64xf32>
    %48 = arith.mulf %38, %38 : vector<1x64xf32>
    %49 = arith.mulf %41, %41 : vector<1x64xf32>
    %50 = arith.addf %48, %49 : vector<1x64xf32>
    %51 = math.sqrt %50 : vector<1x64xf32>
    %52 = arith.mulf %44, %44 : vector<1x64xf32>
    %53 = arith.mulf %47, %47 : vector<1x64xf32>
    %54 = arith.addf %52, %53 : vector<1x64xf32>
    %55 = math.sqrt %54 : vector<1x64xf32>
    %56 = arith.subf %55, %51 : vector<1x64xf32>
    %57 = arith.mulf %56, %56 : vector<1x64xf32>
    %58 = arith.mulf %55, %51 : vector<1x64xf32>
    %59 = arith.mulf %38, %44 : vector<1x64xf32>
    %60 = arith.subf %58, %59 : vector<1x64xf32>
    %61 = arith.mulf %41, %47 : vector<1x64xf32>
    %62 = arith.subf %60, %61 : vector<1x64xf32>
    %cst_28 = arith.constant 2.000000e+00 : f32
    %63 = vector.broadcast %cst_28 : f32 to vector<1x64xf32>
    %64 = arith.mulf %63, %62 : vector<1x64xf32>
    %cst_29 = arith.constant 2.560000e-10 : f32
    %65 = vector.broadcast %cst_29 : f32 to vector<1x64xf32>
    %66 = arith.maximumf %64, %65 : vector<1x64xf32>
    %cst_30 = arith.constant 5.000000e-01 : f32
    %67 = vector.broadcast %cst_30 : f32 to vector<1x64xf32>
    %68 = arith.mulf %67, %57 : vector<1x64xf32>
    %cst_31 = arith.constant 5.000000e-01 : f32
    %69 = vector.broadcast %cst_31 : f32 to vector<1x64xf32>
    %70 = arith.mulf %69, %66 : vector<1x64xf32>
    %71 = arith.addf %68, %70 : vector<1x64xf32>
    %72 = math.sqrt %71 : vector<1x64xf32>
    %73 = vector.shape_cast %72 : vector<1x64xf32> to vector<1x1x64xf32>
    %cst_32 = arith.constant dense<0.000000e+00> : vector<1xf32>
    %74 = vector.multi_reduction <add>, %73, %cst_32 [1, 2] : vector<1x1x64xf32> to vector<1xf32>
    %75 = vector.shape_cast %74 : vector<1xf32> to vector<1x1x1xf32>
    %76 = vector.extract %75[0, 0, 0] : f32 from vector<1x1x1xf32>
    %77 = vector.broadcast %76 : f32 to vector<1x1xf32>
    %cst_33 = arith.constant 6.400000e+01 : f32
    %78 = vector.broadcast %cst_33 : f32 to vector<1x1xf32>
    %79 = arith.divf %77, %78 : vector<1x1xf32>
    %cst_34 = arith.constant 6.250000e-02 : f32
    %80 = vector.broadcast %cst_34 : f32 to vector<1x1xf32>
    %81 = arith.mulf %79, %80 : vector<1x1xf32>
    %c0_35 = arith.constant 0 : index
    %c0_36 = arith.constant 0 : index
    %82 = vector.load %arg8[%c0_35, %c0_36] : memref<1x1xf32, #tpu.memory_space<vmem>>, vector<1x1xf32>
    tpu.vector_store %arg8[%c0_35, %c0_36], %81 {strides = array<i32>} : memref<1x1xf32, #tpu.memory_space<vmem>>, vector<1x1xf32>,
    return
  }
}

</mosaic_0001>

<llo_original>
// kernel: tpu_custom_call.1
$region0: #{tpu_custom_call.1}
  #allocation0 [shape = 'u32[]', space=smem, size = 0x4, offset = 0x4, fixed_abs, tag = 'smem constant byte address 0x4 - core index']
  #allocation1 [shape = 'u32[144,128]{1,0:T(1,128)}', space=vmem, size = 0x12000, scoped, tag = 'internal scratch']
  %s0 = inlined_call_operand.hbm [shape: f32[64,128], index: 0, kind: input, shape index: {}]
  %s1 = inlined_call_operand.hbm [shape: f32[128,128], index: 1, kind: input, shape index: {}]
  %s2 = inlined_call_operand.vmem [shape: f32[1,128], index: 2, kind: input, shape index: {}]
  %s3 = inlined_call_operand.hbm [shape: f32[128,128], index: 3, kind: input, shape index: {}]
  %s4 = inlined_call_operand.vmem [shape: f32[1,128], index: 4, kind: input, shape index: {}]
  %s5 = inlined_call_operand.hbm [shape: f32[128,128], index: 5, kind: input, shape index: {}]
  %s6 = inlined_call_operand.vmem [shape: f32[1,128], index: 6, kind: input, shape index: {}]
  %s7 = inlined_call_operand.hbm [shape: f32[32,128], index: 7, kind: input, shape index: {}]
  %s8 = inlined_call_operand.hbm [shape: f32[1,1], index: 8, kind: output, shape index: {0}]
  %s9 = inlined_call_operand.hbm [shape: f32[64,128], index: 9, kind: output, shape index: {1}]
  %10 = xla_tuple %s8, %s9
  %s11 = sld [smem:[#allocation0]]
  $region70: #{tpu_custom_call.1} parent=0
    _
  %s13 = ssub.s32 1, %s11
  %s14 = scalar_select 0, %s13, %s11
  $region1: #{tpu_custom_call.1} parent=0
    #allocation2 [shape = 'u8[32768]{0}', space=vmem, size = 0x8000, scoped, tag = 'input window, operand 0, single buffered']
    #allocation3 [shape = 's32[1]{0}', space=sflag, size = 0x4, scoped, tag = 'scoped memory for tpu_custom_call.1']
    #allocation4 [shape = 's32[1]{0}', space=sflag, size = 0x4, scoped, tag = 'scoped memory for tpu_custom_call.1']
    #allocation5 [shape = 'u8[65536]{0}', space=vmem, size = 0x10000, scoped, tag = 'input window, operand 1, single buffered']
    #allocation6 [shape = 's32[1]{0}', space=sflag, size = 0x4, scoped, tag = 'scoped memory for tpu_custom_call.1']
    #allocation7 [shape = 'u8[65536]{0}', space=vmem, size = 0x10000, scoped, tag = 'input window, operand 3, single buffered']
    #allocation8 [shape = 'u8[65536]{0}', space=vmem, size = 0x10000, scoped, tag = 'input window, operand 5, single buffered']
    #allocation9 [shape = 's32[1]{0}', space=sflag, size = 0x4, scoped, tag = 'scoped memory for tpu_custom_call.1']
    #allocation10 [shape = 'u8[16384]{0}', space=vmem, size = 0x4000, scoped, tag = 'input window, operand 7, single buffered']
    #allocation11 [shape = 'u8[512]{0}', space=vmem, size = 0x400, scoped, tag = 'output window, operand 0, single buffered']
    #allocation12 [shape = 'u8[32768]{0}', space=vmem, size = 0x8000, scoped, tag = 'output window, operand 1, single buffered']
    #allocation13 [shape = 's32[1]{0}', space=sflag, size = 0x4, scoped, tag = 'scoped memory for tpu_custom_call.1']
    %15 = vsyncpa [#allocation3], 0
    %16 = vsyncpa [#allocation6], 0
    %17 = vsyncpa [#allocation9], 0
    %18 = vsyncpa [#allocation4], 0
    %19 = vsyncpa [#allocation13], 0
    // Predicated region
    $region2: #{tpu_custom_call.1} parent=1 // pred_check
      _
    $region3: #{tpu_custom_call.1} parent=1 // pred_check_branch
      %21 = sbr.rel (0) target = $region5
    $region4: #{tpu_custom_call.1} parent=1 // pred_region
      %s23 = ssub.s32 1024, 1024
      %24 = vsyncadd [#allocation3], %s23
      %s25 = sshll.u32 [#allocation2], 4
      %s26 = int_to_ptr.vmem [resolvable:$true] %s25
      %31 = dma.hbm_to_vmem [thread:$0]  %s0, 1024, %s26, [#allocation3], 128, 128, 8
    $region5: #{tpu_custom_call.1} parent=1 // pred_fallthru
      _
    // Predicated region
    $region6: #{tpu_custom_call.1} parent=1 // pred_check
      _
    $region7: #{tpu_custom_call.1} parent=1 // pred_check_branch
      %33 = sbr.rel (0) target = $region9
    $region8: #{tpu_custom_call.1} parent=1 // pred_region
      %s35 = ssub.s32 2048, 2048
      %36 = vsyncadd [#allocation6], %s35
      %s37 = sshll.u32 [#allocation5], 4
      %s38 = int_to_ptr.vmem [resolvable:$true] %s37
      %43 = dma.hbm_to_vmem [thread:$0]  %s1, 2048, %s38, [#allocation6], 128, 128, 8
    $region9: #{tpu_custom_call.1} parent=1 // pred_fallthru
      _
    // Predicated region
    $region10: #{tpu_custom_call.1} parent=1 // pred_check
      _
    $region11: #{tpu_custom_call.1} parent=1 // pred_check_branch
      %45 = sbr.rel (0) target = $region13
    $region12: #{tpu_custom_call.1} parent=1 // pred_region
      _
    $region13: #{tpu_custom_call.1} parent=1 // pred_fallthru
      _
    // Predicated region
    $region14: #{tpu_custom_call.1} parent=1 // pred_check
      _
    $region15: #{tpu_custom_call.1} parent=1 // pred_check_branch
      %47 = sbr.rel (0) target = $region17
    $region16: #{tpu_custom_call.1} parent=1 // pred_region
      %s49 = ssub.s32 2048, 2048
      %50 = vsyncadd [#allocation6], %s49
      %s51 = sshll.u32 [#allocation7], 4
      %s52 = int_to_ptr.vmem [resolvable:$true] %s51
      %57 = dma.hbm_to_vmem [thread:$0]  %s3, 2048, %s52, [#allocation6], 128, 128, 8
    $region17: #{tpu_custom_call.1} parent=1 // pred_fallthru
      _
    // Predicated region
    $region18: #{tpu_custom_call.1} parent=1 // pred_check
      _
    $region19: #{tpu_custom_call.1} parent=1 // pred_check_branch
      %59 = sbr.rel (0) target = $region21
    $region20: #{tpu_custom_call.1} parent=1 // pred_region
      _
    $region21: #{tpu_custom_call.1} parent=1 // pred_fallthru
      _
    // Predicated region
    $region22: #{tpu_custom_call.1} parent=1 // pred_check
      _
    $region23: #{tpu_custom_call.1} parent=1 // pred_check_branch
      %61 = sbr.rel (0) target = $region25
    $region24: #{tpu_custom_call.1} parent=1 // pred_region
      %s63 = ssub.s32 2048, 2048
      %64 = vsyncadd [#allocation9], %s63
      %s65 = sshll.u32 [#allocation8], 4
      %s66 = int_to_ptr.vmem [resolvable:$true] %s65
      %71 = dma.hbm_to_vmem [thread:$0]  %s5, 2048, %s66, [#allocation9], 128, 128, 8
    $region25: #{tpu_custom_call.1} parent=1 // pred_fallthru
      _
    // Predicated region
    $region26: #{tpu_custom_call.1} parent=1 // pred_check
      _
    $region27: #{tpu_custom_call.1} parent=1 // pred_check_branch
      %73 = sbr.rel (0) target = $region29
    $region28: #{tpu_custom_call.1} parent=1 // pred_region
      _
    $region29: #{tpu_custom_call.1} parent=1 // pred_fallthru
      _
    // Predicated region
    $region30: #{tpu_custom_call.1} parent=1 // pred_check
      _
    $region31: #{tpu_custom_call.1} parent=1 // pred_check_branch
      %75 = sbr.rel (0) target = $region33
    $region32: #{tpu_custom_call.1} parent=1 // pred_region
      %s77 = ssub.s32 512, 512
      %78 = vsyncadd [#allocation9], %s77
      %s79 = sshll.u32 [#allocation10], 4
      %s80 = int_to_ptr.vmem [resolvable:$true] %s79
      %85 = dma.hbm_to_vmem [thread:$0]  %s7, 512, %s80, [#allocation9], 128, 128, 8
    $region33: #{tpu_custom_call.1} parent=1 // pred_fallthru
      _
    // Predicated region
    $region34: #{tpu_custom_call.1} parent=1 // pred_check
      _
    $region35: #{tpu_custom_call.1} parent=1 // pred_check_branch
      %87 = sbr.rel (0) target = $region37
    $region36: #{tpu_custom_call.1} parent=1 // pred_region
      %88 = dma.done [#allocation3], 1024
    $region37: #{tpu_custom_call.1} parent=1 // pred_fallthru
      _
    // Predicated region
    $region38: #{tpu_custom_call.1} parent=1 // pred_check
      _
    $region39: #{tpu_custom_call.1} parent=1 // pred_check_branch
      %90 = sbr.rel (0) target = $region41
    $region40: #{tpu_custom_call.1} parent=1 // pred_region
      %91 = dma.done [#allocation6], 2048
    $region41: #{tpu_custom_call.1} parent=1 // pred_fallthru
      _
    // Predicated region
    $region42: #{tpu_custom_call.1} parent=1 // pred_check
      _
    $region43: #{tpu_custom_call.1} parent=1 // pred_check_branch
      %93 = sbr.rel (0) target = $region45
    $region44: #{tpu_custom_call.1} parent=1 // pred_region
      %94 = dma.done [#allocation6], 2048
    $region45: #{tpu_custom_call.1} parent=1 // pred_fallthru
      _
    // Predicated region
    $region46: #{tpu_custom_call.1} parent=1 // pred_check
      _
    $region47: #{tpu_custom_call.1} parent=1 // pred_check_branch
      %96 = sbr.rel (0) target = $region49
    $region48: #{tpu_custom_call.1} parent=1 // pred_region
      %97 = dma.done [#allocation9], 2048
    $region49: #{tpu_custom_call.1} parent=1 // pred_fallthru
      _
    // Predicated region
    $region50: #{tpu_custom_call.1} parent=1 // pred_check
      _
    $region51: #{tpu_custom_call.1} parent=1 // pred_check_branch
      %99 = sbr.rel (0) target = $region53
    $region52: #{tpu_custom_call.1} parent=1 // pred_region
      %100 = dma.done [#allocation9], 512
    $region53: #{tpu_custom_call.1} parent=1 // pred_fallthru
      _
    %v101 = vld [vmem:[#allocation2] sm:$0xff]
    %v102 = vld [vmem:[#allocation2 + $0x8] sm:$0xff]
    %v103 = vld [vmem:[#allocation2 + $0x10] sm:$0xff]
    %v104 = vld [vmem:[#allocation2 + $0x18] sm:$0xff]
    %v105 = vld [vmem:[#allocation2 + $0x20] sm:$0xff]
    %v106 = vld [vmem:[#allocation2 + $0x28] sm:$0xff]
    %v107 = vld [vmem:[#allocation2 + $0x30] sm:$0xff]
    %v108 = vld [vmem:[#allocation2 + $0x38] sm:$0xff]
    %v109 = vld [vmem:[#allocation5] sm:$0xff]
    %v110 = vld [vmem:[#allocation5 + $0x8] sm:$0xff]
    %v111 = vld [vmem:[#allocation5 + $0x10] sm:$0xff]
    %v112 = vld [vmem:[#allocation5 + $0x18] sm:$0xff]
    %v113 = vld [vmem:[#allocation5 + $0x20] sm:$0xff]
    %v114 = vld [vmem:[#allocation5 + $0x28] sm:$0xff]
    %v115 = vld [vmem:[#allocation5 + $0x30] sm:$0xff]
    %v116 = vld [vmem:[#allocation5 + $0x38] sm:$0xff]
    %v117 = vld [vmem:[#allocation5 + $0x40] sm:$0xff]
    %v118 = vld [vmem:[#allocation5 + $0x48] sm:$0xff]
    %v119 = vld [vmem:[#allocation5 + $0x50] sm:$0xff]
    %v120 = vld [vmem:[#allocation5 + $0x58] sm:$0xff]
    %v121 = vld [vmem:[#allocation5 + $0x60] sm:$0xff]
    %v122 = vld [vmem:[#allocation5 + $0x68] sm:$0xff]
    %v123 = vld [vmem:[#allocation5 + $0x70] sm:$0xff]
    %v124 = vld [vmem:[#allocation5 + $0x78] sm:$0xff]
    %v125 = vld [vmem:[%s2] sm:$0x1]
    %v127 = vlaneseq
    %v128 = vshrl.u32 %v127, 7
    %v129 = vsub.s32 0, %v128
    %v130 = vrot.slane %v125, %v129
    %132 = vmatprep.subr.mxu0 0.0
    %133 = vmatpush1.msra.mxu0 %v109
    %134 = vmatprep.subr.mxu0 0.0
    %135 = vmatpush1.msra.mxu0 %v110
    %136 = vmatprep.subr.mxu0 0.0
    %137 = vmatpush1.msra.mxu0 %v111
    %138 = vmatprep.subr.mxu0 0.0
    %139 = vmatpush1.msra.mxu0 %v112
    %140 = vmatprep.subr.mxu0 0.0
    %141 = vmatpush1.msra.mxu0 %v113
    %142 = vmatprep.subr.mxu0 0.0
    %143 = vmatpush1.msra.mxu0 %v114
    %144 = vmatprep.subr.mxu0 0.0
    %145 = vmatpush1.msra.mxu0 %v115
    %146 = vmatprep.subr.mxu0 0.0
    %147 = vmatpush1.msra.mxu0 %v116
    %148 = vmatprep.subr.mxu0 0.0
    %149 = vmatpush1.msra.mxu0 %v117
    %150 = vmatprep.subr.mxu0 0.0
    %151 = vmatpush1.msra.mxu0 %v118
    %152 = vmatprep.subr.mxu0 0.0
    %153 = vmatpush1.msra.mxu0 %v119
    %154 = vmatprep.subr.mxu0 0.0
    %155 = vmatpush1.msra.mxu0 %v120
    %156 = vmatprep.subr.mxu0 0.0
    %157 = vmatpush1.msra.mxu0 %v121
    %158 = vmatprep.subr.mxu0 0.0
    %159 = vmatpush1.msra.mxu0 %v122
    %160 = vmatprep.subr.mxu0 0.0
    %161 = vmatpush1.msra.mxu0 %v123
    %162 = vmatprep.subr.mxu0 0.0
    %163 = vmatpush1.msra.mxu0 %v124
    %164 = vmatprep.subr.mxu0 0.0
    %165 = vmatpush1.msra.mxu0 0.0
    %166 = vmatprep.subr.mxu0 0.0
    %167 = vmatpush1.msra.mxu0 0.0
    %168 = vmatprep.subr.mxu0 0.0
    %169 = vmatpush1.msra.mxu0 0.0
    %170 = vmatprep.subr.mxu0 0.0
    %171 = vmatpush1.msra.mxu0 0.0
    %172 = vmatprep.subr.mxu0 0.0
    %173 = vmatpush1.msra.mxu0 0.0
    %174 = vmatprep.subr.mxu0 0.0
    %175 = vmatpush1.msra.mxu0 0.0
    %176 = vmatprep.subr.mxu0 0.0
    %177 = vmatpush1.msra.mxu0 0.0
    %178 = vmatprep.subr.mxu0 0.0
    %179 = vmatpush1.msra.mxu0 0.0
    %180 = vmatprep.subr.mxu0 0.0
    %181 = vmatpush1.msra.mxu0 0.0
    %182 = vmatprep.subr.mxu0 0.0
    %183 = vmatpush1.msra.mxu0 0.0
    %184 = vmatprep.subr.mxu0 0.0
    %185 = vmatpush1.msra.mxu0 0.0
    %186 = vmatprep.subr.mxu0 0.0
    %187 = vmatpush1.msra.mxu0 0.0
    %188 = vmatprep.subr.mxu0 0.0
    %189 = vmatpush1.msra.mxu0 0.0
    %190 = vmatprep.subr.mxu0 0.0
    %191 = vmatpush1.msra.mxu0 0.0
    %192 = vmatprep.subr.mxu0 0.0
    %193 = vmatpush1.msra.mxu0 0.0
    %194 = vmatprep.subr.mxu0 0.0
    %195 = vmatpush1.msra.mxu0 0.0
    %196 = vmatprep.mubr.f32.mxu0 0.0
    %197 = vmatmul.mubr.f32.gmra.mrb[0].mxu0 %v101
    %v198 = vpop.f32.mrb[0].mxu0
    %v199 = vadd.f32 %v130, %v198
    %v200 = vpop.f32.mrb[0].mxu0
    %201 = vmatprep.mubr.f32.mxu0 0.0
    %202 = vmatmul.mubr.f32.gmra.mrb[0].mxu0 %v102
    %v203 = vpop.f32.mrb[0].mxu0
    %v204 = vadd.f32 %v130, %v203
    %v205 = vpop.f32.mrb[0].mxu0
    %206 = vmatprep.mubr.f32.mxu0 0.0
    %207 = vmatmul.mubr.f32.gmra.mrb[0].mxu0 %v103
    %v208 = vpop.f32.mrb[0].mxu0
    %v209 = vadd.f32 %v130, %v208
    %v210 = vpop.f32.mrb[0].mxu0
    %211 = vmatprep.mubr.f32.mxu0 0.0
    %212 = vmatmul.mubr.f32.gmra.mrb[0].mxu0 %v104
    %v213 = vpop.f32.mrb[0].mxu0
    %v214 = vadd.f32 %v130, %v213
    %v215 = vpop.f32.mrb[0].mxu0
    %216 = vmatprep.mubr.f32.mxu0 0.0
    %217 = vmatmul.mubr.f32.gmra.mrb[0].mxu0 %v105
    %v218 = vpop.f32.mrb[0].mxu0
    %v219 = vadd.f32 %v130, %v218
    %v220 = vpop.f32.mrb[0].mxu0
    %221 = vmatprep.mubr.f32.mxu0 0.0
    %222 = vmatmul.mubr.f32.gmra.mrb[0].mxu0 %v106
    %v223 = vpop.f32.mrb[0].mxu0
    %v224 = vadd.f32 %v130, %v223
    %v225 = vpop.f32.mrb[0].mxu0
    %226 = vmatprep.mubr.f32.mxu0 0.0
    %227 = vmatmul.mubr.f32.gmra.mrb[0].mxu0 %v107
    %v228 = vpop.f32.mrb[0].mxu0
    %v229 = vadd.f32 %v130, %v228
    %v230 = vpop.f32.mrb[0].mxu0
    %231 = vmatprep.mubr.f32.mxu0 0.0
    %232 = vmatmul.mubr.f32.gmra.mrb[0].mxu0 %v108
    %v233 = vpop.f32.mrb[0].mxu0
    %v234 = vadd.f32 %v130, %v233
    %v235 = vpop.f32.mrb[0].mxu0
    %236 = vdwg.mxu0
    %v237 = vmul.f32 %v199, 0.2
    %v238 = vmul.f32 %v204, 0.2
    %v239 = vmul.f32 %v209, 0.2
    %v240 = vmul.f32 %v214, 0.2
    %v241 = vmul.f32 %v219, 0.2
    %v242 = vmul.f32 %v224, 0.2
    %v243 = vmul.f32 %v229, 0.2
    %v244 = vmul.f32 %v234, 0.2
    %v245 = vmax.f32 %v199, %v237
    %v246 = vmax.f32 %v204, %v238
    %v247 = vmax.f32 %v209, %v239
    %v248 = vmax.f32 %v214, %v240
    %v249 = vmax.f32 %v219, %v241
    %v250 = vmax.f32 %v224, %v242
    %v251 = vmax.f32 %v229, %v243
    %v252 = vmax.f32 %v234, %v244
    %v253 = vld [vmem:[#allocation7] sm:$0xff]
    %v254 = vld [vmem:[#allocation7 + $0x8] sm:$0xff]
    %v255 = vld [vmem:[#allocation7 + $0x10] sm:$0xff]
    %v256 = vld [vmem:[#allocation7 + $0x18] sm:$0xff]
    %v257 = vld [vmem:[#allocation7 + $0x20] sm:$0xff]
    %v258 = vld [vmem:[#allocation7 + $0x28] sm:$0xff]
    %v259 = vld [vmem:[#allocation7 + $0x30] sm:$0xff]
    %v260 = vld [vmem:[#allocation7 + $0x38] sm:$0xff]
    %v261 = vld [vmem:[#allocation7 + $0x40] sm:$0xff]
    %v262 = vld [vmem:[#allocation7 + $0x48] sm:$0xff]
    %v263 = vld [vmem:[#allocation7 + $0x50] sm:$0xff]
    %v264 = vld [vmem:[#allocation7 + $0x58] sm:$0xff]
    %v265 = vld [vmem:[#allocation7 + $0x60] sm:$0xff]
    %v266 = vld [vmem:[#allocation7 + $0x68] sm:$0xff]
    %v267 = vld [vmem:[#allocation7 + $0x70] sm:$0xff]
    %v268 = vld [vmem:[#allocation7 + $0x78] sm:$0xff]
    %v269 = vld [vmem:[%s4] sm:$0x1]
    %v271 = vlaneseq
    %v272 = vshrl.u32 %v271, 7
    %v273 = vsub.s32 0, %v272
    %v274 = vrot.slane %v269, %v273
    %276 = vmatprep.subr.mxu0 0.0
    %277 = vmatpush1.msra.mxu0 %v253
    %278 = vmatprep.subr.mxu0 0.0
    %279 = vmatpush1.msra.mxu0 %v254
    %280 = vmatprep.subr.mxu0 0.0
    %281 = vmatpush1.msra.mxu0 %v255
    %282 = vmatprep.subr.mxu0 0.0
    %283 = vmatpush1.msra.mxu0 %v256
    %284 = vmatprep.subr.mxu0 0.0
    %285 = vmatpush1.msra.mxu0 %v257
    %286 = vmatprep.subr.mxu0 0.0
    %287 = vmatpush1.msra.mxu0 %v258
    %288 = vmatprep.subr.mxu0 0.0
    %289 = vmatpush1.msra.mxu0 %v259
    %290 = vmatprep.subr.mxu0 0.0
    %291 = vmatpush1.msra.mxu0 %v260
    %292 = vmatprep.subr.mxu0 0.0
    %293 = vmatpush1.msra.mxu0 %v261
    %294 = vmatprep.subr.mxu0 0.0
    %295 = vmatpush1.msra.mxu0 %v262
    %296 = vmatprep.subr.mxu0 0.0
    %297 = vmatpush1.msra.mxu0 %v263
    %298 = vmatprep.subr.mxu0 0.0
    %299 = vmatpush1.msra.mxu0 %v264
    %300 = vmatprep.subr.mxu0 0.0
    %301 = vmatpush1.msra.mxu0 %v265
    %302 = vmatprep.subr.mxu0 0.0
    %303 = vmatpush1.msra.mxu0 %v266
    %304 = vmatprep.subr.mxu0 0.0
    %305 = vmatpush1.msra.mxu0 %v267
    %306 = vmatprep.subr.mxu0 0.0
    %307 = vmatpush1.msra.mxu0 %v268
    %308 = vmatprep.subr.mxu0 0.0
    %309 = vmatpush1.msra.mxu0 0.0
    %310 = vmatprep.subr.mxu0 0.0
    %311 = vmatpush1.msra.mxu0 0.0
    %312 = vmatprep.subr.mxu0 0.0
    %313 = vmatpush1.msra.mxu0 0.0
    %314 = vmatprep.subr.mxu0 0.0
    %315 = vmatpush1.msra.mxu0 0.0
    %316 = vmatprep.subr.mxu0 0.0
    %317 = vmatpush1.msra.mxu0 0.0
    %318 = vmatprep.subr.mxu0 0.0
    %319 = vmatpush1.msra.mxu0 0.0
    %320 = vmatprep.subr.mxu0 0.0
    %321 = vmatpush1.msra.mxu0 0.0
    %322 = vmatprep.subr.mxu0 0.0
    %323 = vmatpush1.msra.mxu0 0.0
    %324 = vmatprep.subr.mxu0 0.0
    %325 = vmatpush1.msra.mxu0 0.0
    %326 = vmatprep.subr.mxu0 0.0
    %327 = vmatpush1.msra.mxu0 0.0
    %328 = vmatprep.subr.mxu0 0.0
    %329 = vmatpush1.msra.mxu0 0.0
    %330 = vmatprep.subr.mxu0 0.0
    %331 = vmatpush1.msra.mxu0 0.0
    %332 = vmatprep.subr.mxu0 0.0
    %333 = vmatpush1.msra.mxu0 0.0
    %334 = vmatprep.subr.mxu0 0.0
    %335 = vmatpush1.msra.mxu0 0.0
    %336 = vmatprep.subr.mxu0 0.0
    %337 = vmatpush1.msra.mxu0 0.0
    %338 = vmatprep.subr.mxu0 0.0
    %339 = vmatpush1.msra.mxu0 0.0
    %340 = vmatprep.mubr.f32.mxu0 0.0
    %341 = vmatmul.mubr.f32.gmra.mrb[0].mxu0 %v245
    %v342 = vpop.f32.mrb[0].mxu0
    %v343 = vadd.f32 %v274, %v342
    %v344 = vpop.f32.mrb[0].mxu0
    %345 = vmatprep.mubr.f32.mxu0 0.0
    %346 = vmatmul.mubr.f32.gmra.mrb[0].mxu0 %v246
    %v347 = vpop.f32.mrb[0].mxu0
    %v348 = vadd.f32 %v274, %v347
    %v349 = vpop.f32.mrb[0].mxu0
    %350 = vmatprep.mubr.f32.mxu0 0.0
    %351 = vmatmul.mubr.f32.gmra.mrb[0].mxu0 %v247
    %v352 = vpop.f32.mrb[0].mxu0
    %v353 = vadd.f32 %v274, %v352
    %v354 = vpop.f32.mrb[0].mxu0
    %355 = vmatprep.mubr.f32.mxu0 0.0
    %356 = vmatmul.mubr.f32.gmra.mrb[0].mxu0 %v248
    %v357 = vpop.f32.mrb[0].mxu0
    %v358 = vadd.f32 %v274, %v357
    %v359 = vpop.f32.mrb[0].mxu0
    %360 = vmatprep.mubr.f32.mxu0 0.0
    %361 = vmatmul.mubr.f32.gmra.mrb[0].mxu0 %v249
    %v362 = vpop.f32.mrb[0].mxu0
    %v363 = vadd.f32 %v274, %v362
    %v364 = vpop.f32.mrb[0].mxu0
    %365 = vmatprep.mubr.f32.mxu0 0.0
    %366 = vmatmul.mubr.f32.gmra.mrb[0].mxu0 %v250
    %v367 = vpop.f32.mrb[0].mxu0
    %v368 = vadd.f32 %v274, %v367
    %v369 = vpop.f32.mrb[0].mxu0
    %370 = vmatprep.mubr.f32.mxu0 0.0
    %371 = vmatmul.mubr.f32.gmra.mrb[0].mxu0 %v251
    %v372 = vpop.f32.mrb[0].mxu0
    %v373 = vadd.f32 %v274, %v372
    %v374 = vpop.f32.mrb[0].mxu0
    %375 = vmatprep.mubr.f32.mxu0 0.0
    %376 = vmatmul.mubr.f32.gmra.mrb[0].mxu0 %v252
    %v377 = vpop.f32.mrb[0].mxu0
    %v378 = vadd.f32 %v274, %v377
    %v379 = vpop.f32.mrb[0].mxu0
    %380 = vdwg.mxu0
    %v381 = vmul.f32 %v343, 0.2
    %v382 = vmul.f32 %v348, 0.2
    %v383 = vmul.f32 %v353, 0.2
    %v384 = vmul.f32 %v358, 0.2
    %v385 = vmul.f32 %v363, 0.2
    %v386 = vmul.f32 %v368, 0.2
    %v387 = vmul.f32 %v373, 0.2
    %v388 = vmul.f32 %v378, 0.2
    %v389 = vmax.f32 %v343, %v381
    %v390 = vmax.f32 %v348, %v382
    %v391 = vmax.f32 %v353, %v383
    %v392 = vmax.f32 %v358, %v384
    %v393 = vmax.f32 %v363, %v385
    %v394 = vmax.f32 %v368, %v386
    %v395 = vmax.f32 %v373, %v387
    %v396 = vmax.f32 %v378, %v388
    %v397 = vld [vmem:[#allocation8] sm:$0xff]
    %v398 = vld [vmem:[#allocation8 + $0x8] sm:$0xff]
    %v399 = vld [vmem:[#allocation8 + $0x10] sm:$0xff]
    %v400 = vld [vmem:[#allocation8 + $0x18] sm:$0xff]
    %v401 = vld [vmem:[#allocation8 + $0x20] sm:$0xff]
    %v402 = vld [vmem:[#allocation8 + $0x28] sm:$0xff]
    %v403 = vld [vmem:[#allocation8 + $0x30] sm:$0xff]
    %v404 = vld [vmem:[#allocation8 + $0x38] sm:$0xff]
    %v405 = vld [vmem:[#allocation8 + $0x40] sm:$0xff]
    %v406 = vld [vmem:[#allocation8 + $0x48] sm:$0xff]
    %v407 = vld [vmem:[#allocation8 + $0x50] sm:$0xff]
    %v408 = vld [vmem:[#allocation8 + $0x58] sm:$0xff]
    %v409 = vld [vmem:[#allocation8 + $0x60] sm:$0xff]
    %v410 = vld [vmem:[#allocation8 + $0x68] sm:$0xff]
    %v411 = vld [vmem:[#allocation8 + $0x70] sm:$0xff]
    %v412 = vld [vmem:[#allocation8 + $0x78] sm:$0xff]
    %v413 = vld [vmem:[%s6] sm:$0x1]
    %v415 = vlaneseq
    %v416 = vshrl.u32 %v415, 7
    %v417 = vsub.s32 0, %v416
    %v418 = vrot.slane %v413, %v417
    %420 = vmatprep.subr.mxu0 0.0
    %421 = vmatpush1.msra.mxu0 %v397
    %422 = vmatprep.subr.mxu0 0.0
    %423 = vmatpush1.msra.mxu0 %v398
    %424 = vmatprep.subr.mxu0 0.0
    %425 = vmatpush1.msra.mxu0 %v399
    %426 = vmatprep.subr.mxu0 0.0
    %427 = vmatpush1.msra.mxu0 %v400
    %428 = vmatprep.subr.mxu0 0.0
    %429 = vmatpush1.msra.mxu0 %v401
    %430 = vmatprep.subr.mxu0 0.0
    %431 = vmatpush1.msra.mxu0 %v402
    %432 = vmatprep.subr.mxu0 0.0
    %433 = vmatpush1.msra.mxu0 %v403
    %434 = vmatprep.subr.mxu0 0.0
    %435 = vmatpush1.msra.mxu0 %v404
    %436 = vmatprep.subr.mxu0 0.0
    %437 = vmatpush1.msra.mxu0 %v405
    %438 = vmatprep.subr.mxu0 0.0
    %439 = vmatpush1.msra.mxu0 %v406
    %440 = vmatprep.subr.mxu0 0.0
    %441 = vmatpush1.msra.mxu0 %v407
    %442 = vmatprep.subr.mxu0 0.0
    %443 = vmatpush1.msra.mxu0 %v408
    %444 = vmatprep.subr.mxu0 0.0
    %445 = vmatpush1.msra.mxu0 %v409
    %446 = vmatprep.subr.mxu0 0.0
    %447 = vmatpush1.msra.mxu0 %v410
    %448 = vmatprep.subr.mxu0 0.0
    %449 = vmatpush1.msra.mxu0 %v411
    %450 = vmatprep.subr.mxu0 0.0
    %451 = vmatpush1.msra.mxu0 %v412
    %452 = vmatprep.subr.mxu0 0.0
    %453 = vmatpush1.msra.mxu0 0.0
    %454 = vmatprep.subr.mxu0 0.0
    %455 = vmatpush1.msra.mxu0 0.0
    %456 = vmatprep.subr.mxu0 0.0
    %457 = vmatpush1.msra.mxu0 0.0
    %458 = vmatprep.subr.mxu0 0.0
    %459 = vmatpush1.msra.mxu0 0.0
    %460 = vmatprep.subr.mxu0 0.0
    %461 = vmatpush1.msra.mxu0 0.0
    %462 = vmatprep.subr.mxu0 0.0
    %463 = vmatpush1.msra.mxu0 0.0
    %464 = vmatprep.subr.mxu0 0.0
    %465 = vmatpush1.msra.mxu0 0.0
    %466 = vmatprep.subr.mxu0 0.0
    %467 = vmatpush1.msra.mxu0 0.0
    %468 = vmatprep.subr.mxu0 0.0
    %469 = vmatpush1.msra.mxu0 0.0
    %470 = vmatprep.subr.mxu0 0.0
    %471 = vmatpush1.msra.mxu0 0.0
    %472 = vmatprep.subr.mxu0 0.0
    %473 = vmatpush1.msra.mxu0 0.0
    %474 = vmatprep.subr.mxu0 0.0
    %475 = vmatpush1.msra.mxu0 0.0
    %476 = vmatprep.subr.mxu0 0.0
    %477 = vmatpush1.msra.mxu0 0.0
    %478 = vmatprep.subr.mxu0 0.0
    %479 = vmatpush1.msra.mxu0 0.0
    %480 = vmatprep.subr.mxu0 0.0
    %481 = vmatpush1.msra.mxu0 0.0
    %482 = vmatprep.subr.mxu0 0.0
    %483 = vmatpush1.msra.mxu0 0.0
    %484 = vmatprep.mubr.f32.mxu0 0.0
    %485 = vmatmul.mubr.f32.gmra.mrb[0].mxu0 %v389
    %v486 = vpop.f32.mrb[0].mxu0
    %v487 = vadd.f32 %v418, %v486
    %v488 = vpop.f32.mrb[0].mxu0
    %489 = vmatprep.mubr.f32.mxu0 0.0
    %490 = vmatmul.mubr.f32.gmra.mrb[0].mxu0 %v390
    %v491 = vpop.f32.mrb[0].mxu0
    %v492 = vadd.f32 %v418, %v491
    %v493 = vpop.f32.mrb[0].mxu0
    %494 = vmatprep.mubr.f32.mxu0 0.0
    %495 = vmatmul.mubr.f32.gmra.mrb[0].mxu0 %v391
    %v496 = vpop.f32.mrb[0].mxu0
    %v497 = vadd.f32 %v418, %v496
    %v498 = vpop.f32.mrb[0].mxu0
    %499 = vmatprep.mubr.f32.mxu0 0.0
    %500 = vmatmul.mubr.f32.gmra.mrb[0].mxu0 %v392
    %v501 = vpop.f32.mrb[0].mxu0
    %v502 = vadd.f32 %v418, %v501
    %v503 = vpop.f32.mrb[0].mxu0
    %504 = vmatprep.mubr.f32.mxu0 0.0
    %505 = vmatmul.mubr.f32.gmra.mrb[0].mxu0 %v393
    %v506 = vpop.f32.mrb[0].mxu0
    %v507 = vadd.f32 %v418, %v506
    %v508 = vpop.f32.mrb[0].mxu0
    %509 = vmatprep.mubr.f32.mxu0 0.0
    %510 = vmatmul.mubr.f32.gmra.mrb[0].mxu0 %v394
    %v511 = vpop.f32.mrb[0].mxu0
    %v512 = vadd.f32 %v418, %v511
    %v513 = vpop.f32.mrb[0].mxu0
    %514 = vmatprep.mubr.f32.mxu0 0.0
    %515 = vmatmul.mubr.f32.gmra.mrb[0].mxu0 %v395
    %v516 = vpop.f32.mrb[0].mxu0
    %v517 = vadd.f32 %v418, %v516
    %v518 = vpop.f32.mrb[0].mxu0
    %519 = vmatprep.mubr.f32.mxu0 0.0
    %520 = vmatmul.mubr.f32.gmra.mrb[0].mxu0 %v396
    %v521 = vpop.f32.mrb[0].mxu0
    %v522 = vadd.f32 %v418, %v521
    %v523 = vpop.f32.mrb[0].mxu0
    %524 = vdwg.mxu0
    %v525 = vtanh.pop %v487
    %v526 = vtanh.pop %v492
    %v527 = vtanh.pop %v497
    %v528 = vtanh.pop %v502
    %v529 = vtanh.pop %v507
    %v530 = vtanh.pop %v512
    %v531 = vtanh.pop %v517
    %v532 = vtanh.pop %v522
    %533 = vst [vmem:[#allocation12] sm:$0xff] %v525
    %534 = vst [vmem:[#allocation12 + $0x8] sm:$0xff] %v526
    %535 = vst [vmem:[#allocation12 + $0x10] sm:$0xff] %v527
    %536 = vst [vmem:[#allocation12 + $0x18] sm:$0xff] %v528
    %537 = vst [vmem:[#allocation12 + $0x20] sm:$0xff] %v529
    %538 = vst [vmem:[#allocation12 + $0x28] sm:$0xff] %v530
    %539 = vst [vmem:[#allocation12 + $0x30] sm:$0xff] %v531
    %540 = vst [vmem:[#allocation12 + $0x38] sm:$0xff] %v532
    %v541 = vld [vmem:[#allocation10] sm:$0xff]
    %v542 = vld [vmem:[#allocation10 + $0x8] sm:$0xff]
    %v543 = vld [vmem:[#allocation10 + $0x10] sm:$0xff]
    %v544 = vld [vmem:[#allocation10 + $0x18] sm:$0xff]
    %v545 = vmul.f32 %v541, %v541
    %v546 = vmul.f32 %v542, %v542
    %v547 = vmul.f32 %v543, %v543
    %v548 = vmul.f32 %v544, %v544
    %549 = vadd.xlane.f32.xlu0 %v545
    %v550 = vpop.xlane.xlu0 %549
    %551 = vadd.xlane.f32.xlu0 %v546
    %v552 = vpop.xlane.xlu0 %551
    %553 = vadd.xlane.f32.xlu0 %v547
    %v554 = vpop.xlane.xlu0 %553
    %555 = vadd.xlane.f32.xlu0 %v548
    %v556 = vpop.xlane.xlu0 %555
    %v557 = vmax.f32 %v550, 1e-24
    %v558 = vmax.f32 %v552, 1e-24
    %v559 = vmax.f32 %v554, 1e-24
    %v560 = vmax.f32 %v556, 1e-24
    %v561 = vrsqrt.pop %v557
    %v562 = vrsqrt.pop %v558
    %v563 = vrsqrt.pop %v559
    %v564 = vrsqrt.pop %v560
    %v565 = vmul.f32 %v541, %v561
    %v566 = vmul.f32 %v542, %v562
    %v567 = vmul.f32 %v543, %v563
    %v568 = vmul.f32 %v544, %v564
    %569 = vmatprep.subr.mxu0 0.0
    %570 = vmatpush1.xpose.msra.mxu0 %v525
    %571 = vmatprep.subr.mxu0 0.0
    %572 = vmatpush1.xpose.msra.mxu0 %v526
    %573 = vmatprep.subr.mxu0 0.0
    %574 = vmatpush1.xpose.msra.mxu0 %v527
    %575 = vmatprep.subr.mxu0 0.0
    %576 = vmatpush1.xpose.msra.mxu0 %v528
    %577 = vmatprep.subr.mxu0 0.0
    %578 = vmatpush1.xpose.msra.mxu0 %v529
    %579 = vmatprep.subr.mxu0 0.0
    %580 = vmatpush1.xpose.msra.mxu0 %v530
    %581 = vmatprep.subr.mxu0 0.0
    %582 = vmatpush1.xpose.msra.mxu0 %v531
    %583 = vmatprep.subr.mxu0 0.0
    %584 = vmatpush1.xpose.msra.mxu0 %v532
    %585 = vmatprep.subr.mxu0 0.0
    %586 = vmatpush1.xpose.msra.mxu0 0.0
    %587 = vmatprep.subr.mxu0 0.0
    %588 = vmatpush1.xpose.msra.mxu0 0.0
    %589 = vmatprep.subr.mxu0 0.0
    %590 = vmatpush1.xpose.msra.mxu0 0.0
    %591 = vmatprep.subr.mxu0 0.0
    %592 = vmatpush1.xpose.msra.mxu0 0.0
    %593 = vmatprep.subr.mxu0 0.0
    %594 = vmatpush1.xpose.msra.mxu0 0.0
    %595 = vmatprep.subr.mxu0 0.0
    %596 = vmatpush1.xpose.msra.mxu0 0.0
    %597 = vmatprep.subr.mxu0 0.0
    %598 = vmatpush1.xpose.msra.mxu0 0.0
    %599 = vmatprep.subr.mxu0 0.0
    %600 = vmatpush1.xpose.msra.mxu0 0.0
    %601 = vmatprep.subr.mxu0 0.0
    %602 = vmatpush1.xpose.msra.mxu0 0.0
    %603 = vmatprep.subr.mxu0 0.0
    %604 = vmatpush1.xpose.msra.mxu0 0.0
    %605 = vmatprep.subr.mxu0 0.0
    %606 = vmatpush1.xpose.msra.mxu0 0.0
    %607 = vmatprep.subr.mxu0 0.0
    %608 = vmatpush1.xpose.msra.mxu0 0.0
    %609 = vmatprep.subr.mxu0 0.0
    %610 = vmatpush1.xpose.msra.mxu0 0.0
    %611 = vmatprep.subr.mxu0 0.0
    %612 = vmatpush1.xpose.msra.mxu0 0.0
    %613 = vmatprep.subr.mxu0 0.0
    %614 = vmatpush1.xpose.msra.mxu0 0.0
    %615 = vmatprep.subr.mxu0 0.0
    %616 = vmatpush1.xpose.msra.mxu0 0.0
    %617 = vmatprep.subr.mxu0 0.0
    %618 = vmatpush1.xpose.msra.mxu0 0.0
    %619 = vmatprep.subr.mxu0 0.0
    %620 = vmatpush1.xpose.msra.mxu0 0.0
    %621 = vmatprep.subr.mxu0 0.0
    %622 = vmatpush1.xpose.msra.mxu0 0.0
    %623 = vmatprep.subr.mxu0 0.0
    %624 = vmatpush1.xpose.msra.mxu0 0.0
    %625 = vmatprep.subr.mxu0 0.0
    %626 = vmatpush1.xpose.msra.mxu0 0.0
    %627 = vmatprep.subr.mxu0 0.0
    %628 = vmatpush1.xpose.msra.mxu0 0.0
    %629 = vmatprep.subr.mxu0 0.0
    %630 = vmatpush1.xpose.msra.mxu0 0.0
    %631 = vmatprep.subr.mxu0 0.0
    %632 = vmatpush1.xpose.msra.mxu0 0.0
    %633 = vmatprep.mubr.f32.mxu0 0.0
    %634 = vmatmul.mubr.f32.gmra.mrb[0].mxu0 %v565
    %v635 = vpop.f32.mrb[0].mxu0
    %v636 = vadd.f32 0.0, %v635
    %v637 = vpop.f32.mrb[0].mxu0
    %638 = vmatprep.mubr.f32.mxu0 0.0
    %639 = vmatmul.mubr.f32.gmra.mrb[0].mxu0 %v566
    %v640 = vpop.f32.mrb[0].mxu0
    %v641 = vadd.f32 0.0, %v640
    %v642 = vpop.f32.mrb[0].mxu0
    %643 = vmatprep.mubr.f32.mxu0 0.0
    %644 = vmatmul.mubr.f32.gmra.mrb[0].mxu0 %v567
    %v645 = vpop.f32.mrb[0].mxu0
    %v646 = vadd.f32 0.0, %v645
    %v647 = vpop.f32.mrb[0].mxu0
    %648 = vmatprep.mubr.f32.mxu0 0.0
    %649 = vmatmul.mubr.f32.gmra.mrb[0].mxu0 %v568
    %v650 = vpop.f32.mrb[0].mxu0
    %v651 = vadd.f32 0.0, %v650
    %v652 = vpop.f32.mrb[0].mxu0
    %653 = vdwg.mxu0
    %v654 = vand.u32 2147483647, %v636
    %vm655 = vcmp.le.f32.partialorder %v654, 0.7853982
    %vm656 = vcmp.lt.s32.totalorder %v636, 0
    %v657 = vand.u32 %v636, 2139095040
    %v658 = vshrl.u32 %v657, 23
    %v659 = vsub.s32 %v658, 127
    %v660 = vand.u32 2147483647, %v636
    %v661 = vand.u32 %v660, 8388607
    %v662 = vor.u32 %v661, 8388608
    %v663 = vsub.s32 0, %v662
    %v664 = vadd.s32 %v659, 1
    %vm665 = vcmp.gt.s32.totalorder %v664, 0
    %v666 = vsel %vm665, %v664, 0
    %v667 = vshrl.u32 %v666, 5
    %v668 = vand.u32 %v666, 31
    %v669 = vsub.s32 32, %v668
    %v670 = vshrl.u32 683565275, %v669
    %v671 = vshll.u32 683565275, %v668
    %v672 = vshrl.u32 2475754826, %v669
    %v673 = vor.u32 %v671, %v672
    %v674 = vshll.u32 2475754826, %v668
    %v675 = vshrl.u32 2131351028, %v669
    %v676 = vor.u32 %v674, %v675
    %v677 = vshll.u32 2131351028, %v668
    %v678 = vshrl.u32 2102212464, %v669
    %v679 = vor.u32 %v677, %v678
    %v680 = vshll.u32 2102212464, %v668
    %v681 = vshrl.u32 920167782, %v669
    %v682 = vor.u32 %v680, %v681
    %v683 = vshll.u32 920167782, %v668
    %v684 = vshrl.u32 1326507024, %v669
    %v685 = vor.u32 %v683, %v684
    %vm686 = vcmp.lt.s32.totalorder %v667, 1
    %vm687 = vcmp.lt.s32.totalorder %v667, 2
    %vm688 = vcmp.lt.s32.totalorder %v667, 3
    %vm689 = vcmp.lt.s32.totalorder %v667, 4
    %v690 = vsel %vm686, %v670, %v673
    %v691 = vsel %vm689, %v679, 2102212464
    %v692 = vsel %vm688, %v676, %v691
    %v693 = vsel %vm687, %v690, %v692
    %v694 = vsel %vm686, %v673, %v676
    %v695 = vsel %vm689, %v682, 920167782
    %v696 = vsel %vm688, %v679, %v695
    %v697 = vsel %vm687, %v694, %v696
    %v698 = vsel %vm686, %v676, %v679
    %v699 = vsel %vm689, %v685, 1326507024
    %v700 = vsel %vm688, %v682, %v699
    %v701 = vsel %vm687, %v698, %v700
    %v702 = vshll.u32 %v662, 8
    %v703 = vmul.u32.u64.compose %v702, %v701
    %v704 = vextract.low.u32 %v703
    %v705 = vextract.high.u32 %v703
    %v706 = vmul.u32.u64.compose %v702, %v697
    %v707 = vextract.low.u32 %v706
    %v708 = vextract.high.u32 %v706
    %v709 = vmul.u32 %v702, %v693
    %v710 = vadd.s32 %v705, %v707
    %vm711 = vc.u32 %v705, %v707
    %v712 = vadd.s32 %v708, 1
    %v713 = vsel %vm711, %v712, %v708
    %v714 = vadd.s32 %v709, %v713
    %v715 = vadd.s32 %v714, 536870912
    %v716 = vshrl.u32 %v715, 30
    %v717 = vshll.u32 %v716, 30
    %v718 = vsub.s32 %v714, %v717
    %vm719 = vcmp.lt.s32.totalorder %v718, 0
    %v720 = vsub.s32 0, %v718
    %v721 = vsel %vm719, %v720, %v718
    %v722 = vclz %v721
    %v723 = vsub.s32 %v722, 2
    %vm724 = vcmp.gt.s32.totalorder 0, %v723
    %v725 = vsel %vm724, 0, %v723
    %v726 = vsub.s32 32, %v725
    %v727 = vshll.u32 %v718, %v725
    %v728 = vshrl.u32 %v710, %v726
    %v729 = vor.u32 %v727, %v728
    %v730 = vsub.s32 4294967266, %v725
    %v731 = vadd.s32 %v730, 127
    %v732 = vshll.u32 %v731, 23
    %v733 = vor.u32 4788187, %v732
    %v734 = vand.u32 2147483647, %v733
    %v736 = vcvt.s32.f32 %v729
    %v737 = vmul.f32 %v736, %v734
    %v738 = vxor.u32 %v737, 2147483648
    %v739 = vsel %vm656, %v738, %v737
    %v740 = vsub.s32 4, %v716
    %v741 = vsel %vm656, %v740, %v716
    %v742 = vsel %vm655, %v636, %v739
    %v743 = vsel %vm655, 0, %v741
    %v744 = vcosq.f32.pop %v742
    %v745 = vsinq.f32.pop %v742
    %vm746 = vweird.f32 %v636
    %v747 = vand.u32 %v743, 3
    %vm748 = vcmp.lt.s32.totalorder %v747, 2
    %vm749 = vcmp.eq.s32.totalorder %v747, 0
    %v750 = vxor.u32 %v745, 2147483648
    %v751 = vsel %vm749, %v744, %v750
    %vm752 = vcmp.eq.s32.totalorder %v747, 2
    %v753 = vxor.u32 %v744, 2147483648
    %v754 = vsel %vm752, %v753, %v745
    %v755 = vsel %vm748, %v751, %v754
    %v756 = vsel %vm746, nan, %v755
    %v757 = vand.u32 2147483647, %v641
    %vm758 = vcmp.le.f32.partialorder %v757, 0.7853982
    %vm759 = vcmp.lt.s32.totalorder %v641, 0
    %v760 = vand.u32 %v641, 2139095040
    %v761 = vshrl.u32 %v760, 23
    %v762 = vsub.s32 %v761, 127
    %v763 = vand.u32 2147483647, %v641
    %v764 = vand.u32 %v763, 8388607
    %v765 = vor.u32 %v764, 8388608
    %v766 = vsub.s32 0, %v765
    %v767 = vadd.s32 %v762, 1
    %vm768 = vcmp.gt.s32.totalorder %v767, 0
    %v769 = vsel %vm768, %v767, 0
    %v770 = vshrl.u32 %v769, 5
    %v771 = vand.u32 %v769, 31
    %v772 = vsub.s32 32, %v771
    %v773 = vshrl.u32 683565275, %v772
    %v774 = vshll.u32 683565275, %v771
    %v775 = vshrl.u32 2475754826, %v772
    %v776 = vor.u32 %v774, %v775
    %v777 = vshll.u32 2475754826, %v771
    %v778 = vshrl.u32 2131351028, %v772
    %v779 = vor.u32 %v777, %v778
    %v780 = vshll.u32 2131351028, %v771
    %v781 = vshrl.u32 2102212464, %v772
    %v782 = vor.u32 %v780, %v781
    %v783 = vshll.u32 2102212464, %v771
    %v784 = vshrl.u32 920167782, %v772
    %v785 = vor.u32 %v783, %v784
    %v786 = vshll.u32 920167782, %v771
    %v787 = vshrl.u32 1326507024, %v772
    %v788 = vor.u32 %v786, %v787
    %vm789 = vcmp.lt.s32.totalorder %v770, 1
    %vm790 = vcmp.lt.s32.totalorder %v770, 2
    %vm791 = vcmp.lt.s32.totalorder %v770, 3
    %vm792 = vcmp.lt.s32.totalorder %v770, 4
    %v793 = vsel %vm789, %v773, %v776
    %v794 = vsel %vm792, %v782, 2102212464
    %v795 = vsel %vm791, %v779, %v794
    %v796 = vsel %vm790, %v793, %v795
    %v797 = vsel %vm789, %v776, %v779
    %v798 = vsel %vm792, %v785, 920167782
    %v799 = vsel %vm791, %v782, %v798
    %v800 = vsel %vm790, %v797, %v799
    %v801 = vsel %vm789, %v779, %v782
    %v802 = vsel %vm792, %v788, 1326507024
    %v803 = vsel %vm791, %v785, %v802
    %v804 = vsel %vm790, %v801, %v803
    %v805 = vshll.u32 %v765, 8
    %v806 = vmul.u32.u64.compose %v805, %v804
    %v807 = vextract.low.u32 %v806
    %v808 = vextract.high.u32 %v806
    %v809 = vmul.u32.u64.compose %v805, %v800
    %v810 = vextract.low.u32 %v809
    %v811 = vextract.high.u32 %v809
    %v812 = vmul.u32 %v805, %v796
    %v813 = vadd.s32 %v808, %v810
    %vm814 = vc.u32 %v808, %v810
    %v815 = vadd.s32 %v811, 1
    %v816 = vsel %vm814, %v815, %v811
    %v817 = vadd.s32 %v812, %v816
    %v818 = vadd.s32 %v817, 536870912
    %v819 = vshrl.u32 %v818, 30
    %v820 = vshll.u32 %v819, 30
    %v821 = vsub.s32 %v817, %v820
    %vm822 = vcmp.lt.s32.totalorder %v821, 0
    %v823 = vsub.s32 0, %v821
    %v824 = vsel %vm822, %v823, %v821
    %v825 = vclz %v824
    %v826 = vsub.s32 %v825, 2
    %vm827 = vcmp.gt.s32.totalorder 0, %v826
    %v828 = vsel %vm827, 0, %v826
    %v829 = vsub.s32 32, %v828
    %v830 = vshll.u32 %v821, %v828
    %v831 = vshrl.u32 %v813, %v829
    %v832 = vor.u32 %v830, %v831
    %v833 = vsub.s32 4294967266, %v828
    %v834 = vadd.s32 %v833, 127
    %v835 = vshll.u32 %v834, 23
    %v836 = vor.u32 4788187, %v835
    %v837 = vand.u32 2147483647, %v836
    %v839 = vcvt.s32.f32 %v832
    %v840 = vmul.f32 %v839, %v837
    %v841 = vxor.u32 %v840, 2147483648
    %v842 = vsel %vm759, %v841, %v840
    %v843 = vsub.s32 4, %v819
    %v844 = vsel %vm759, %v843, %v819
    %v845 = vsel %vm758, %v641, %v842
    %v846 = vsel %vm758, 0, %v844
    %v847 = vcosq.f32.pop %v845
    %v848 = vsinq.f32.pop %v845
    %vm849 = vweird.f32 %v641
    %v850 = vand.u32 %v846, 3
    %vm851 = vcmp.lt.s32.totalorder %v850, 2
    %vm852 = vcmp.eq.s32.totalorder %v850, 0
    %v853 = vxor.u32 %v848, 2147483648
    %v854 = vsel %vm852, %v847, %v853
    %vm855 = vcmp.eq.s32.totalorder %v850, 2
    %v856 = vxor.u32 %v847, 2147483648
    %v857 = vsel %vm855, %v856, %v848
    %v858 = vsel %vm851, %v854, %v857
    %v859 = vsel %vm849, nan, %v858
    %v860 = vand.u32 2147483647, %v646
    %vm861 = vcmp.le.f32.partialorder %v860, 0.7853982
    %vm862 = vcmp.lt.s32.totalorder %v646, 0
    %v863 = vand.u32 %v646, 2139095040
    %v864 = vshrl.u32 %v863, 23
    %v865 = vsub.s32 %v864, 127
    %v866 = vand.u32 2147483647, %v646
    %v867 = vand.u32 %v866, 8388607
    %v868 = vor.u32 %v867, 8388608
    %v869 = vsub.s32 0, %v868
    %v870 = vadd.s32 %v865, 1
    %vm871 = vcmp.gt.s32.totalorder %v870, 0
    %v872 = vsel %vm871, %v870, 0
    %v873 = vshrl.u32 %v872, 5
    %v874 = vand.u32 %v872, 31
    %v875 = vsub.s32 32, %v874
    %v876 = vshrl.u32 683565275, %v875
    %v877 = vshll.u32 683565275, %v874
    %v878 = vshrl.u32 2475754826, %v875
    %v879 = vor.u32 %v877, %v878
    %v880 = vshll.u32 2475754826, %v874
    %v881 = vshrl.u32 2131351028, %v875
    %v882 = vor.u32 %v880, %v881
    %v883 = vshll.u32 2131351028, %v874
    %v884 = vshrl.u32 2102212464, %v875
    %v885 = vor.u32 %v883, %v884
    %v886 = vshll.u32 2102212464, %v874
    %v887 = vshrl.u32 920167782, %v875
    %v888 = vor.u32 %v886, %v887
    %v889 = vshll.u32 920167782, %v874
    %v890 = vshrl.u32 1326507024, %v875
    %v891 = vor.u32 %v889, %v890
    %vm892 = vcmp.lt.s32.totalorder %v873, 1
    %vm893 = vcmp.lt.s32.totalorder %v873, 2
    %vm894 = vcmp.lt.s32.totalorder %v873, 3
    %vm895 = vcmp.lt.s32.totalorder %v873, 4
    %v896 = vsel %vm892, %v876, %v879
    %v897 = vsel %vm895, %v885, 2102212464
    %v898 = vsel %vm894, %v882, %v897
    %v899 = vsel %vm893, %v896, %v898
    %v900 = vsel %vm892, %v879, %v882
    %v901 = vsel %vm895, %v888, 920167782
    %v902 = vsel %vm894, %v885, %v901
    %v903 = vsel %vm893, %v900, %v902
    %v904 = vsel %vm892, %v882, %v885
    %v905 = vsel %vm895, %v891, 1326507024
    %v906 = vsel %vm894, %v888, %v905
    %v907 = vsel %vm893, %v904, %v906
    %v908 = vshll.u32 %v868, 8
    %v909 = vmul.u32.u64.compose %v908, %v907
    %v910 = vextract.low.u32 %v909
    %v911 = vextract.high.u32 %v909
    %v912 = vmul.u32.u64.compose %v908, %v903
    %v913 = vextract.low.u32 %v912
    %v914 = vextract.high.u32 %v912
    %v915 = vmul.u32 %v908, %v899
    %v916 = vadd.s32 %v911, %v913
    %vm917 = vc.u32 %v911, %v913
    %v918 = vadd.s32 %v914, 1
    %v919 = vsel %vm917, %v918, %v914
    %v920 = vadd.s32 %v915, %v919
    %v921 = vadd.s32 %v920, 536870912
    %v922 = vshrl.u32 %v921, 30
    %v923 = vshll.u32 %v922, 30
    %v924 = vsub.s32 %v920, %v923
    %vm925 = vcmp.lt.s32.totalorder %v924, 0
    %v926 = vsub.s32 0, %v924
    %v927 = vsel %vm925, %v926, %v924
    %v928 = vclz %v927
    %v929 = vsub.s32 %v928, 2
    %vm930 = vcmp.gt.s32.totalorder 0, %v929
    %v931 = vsel %vm930, 0, %v929
    %v932 = vsub.s32 32, %v931
    %v933 = vshll.u32 %v924, %v931
    %v934 = vshrl.u32 %v916, %v932
    %v935 = vor.u32 %v933, %v934
    %v936 = vsub.s32 4294967266, %v931
    %v937 = vadd.s32 %v936, 127
    %v938 = vshll.u32 %v937, 23
    %v939 = vor.u32 4788187, %v938
    %v940 = vand.u32 2147483647, %v939
    %v942 = vcvt.s32.f32 %v935
    %v943 = vmul.f32 %v942, %v940
    %v944 = vxor.u32 %v943, 2147483648
    %v945 = vsel %vm862, %v944, %v943
    %v946 = vsub.s32 4, %v922
    %v947 = vsel %vm862, %v946, %v922
    %v948 = vsel %vm861, %v646, %v945
    %v949 = vsel %vm861, 0, %v947
    %v950 = vcosq.f32.pop %v948
    %v951 = vsinq.f32.pop %v948
    %vm952 = vweird.f32 %v646
    %v953 = vand.u32 %v949, 3
    %vm954 = vcmp.lt.s32.totalorder %v953, 2
    %vm955 = vcmp.eq.s32.totalorder %v953, 0
    %v956 = vxor.u32 %v951, 2147483648
    %v957 = vsel %vm955, %v950, %v956
    %vm958 = vcmp.eq.s32.totalorder %v953, 2
    %v959 = vxor.u32 %v950, 2147483648
    %v960 = vsel %vm958, %v959, %v951
    %v961 = vsel %vm954, %v957, %v960
    %v962 = vsel %vm952, nan, %v961
    %v963 = vand.u32 2147483647, %v651
    %vm964 = vcmp.le.f32.partialorder %v963, 0.7853982
    %vm965 = vcmp.lt.s32.totalorder %v651, 0
    %v966 = vand.u32 %v651, 2139095040
    %v967 = vshrl.u32 %v966, 23
    %v968 = vsub.s32 %v967, 127
    %v969 = vand.u32 2147483647, %v651
    %v970 = vand.u32 %v969, 8388607
    %v971 = vor.u32 %v970, 8388608
    %v972 = vsub.s32 0, %v971
    %v973 = vadd.s32 %v968, 1
    %vm974 = vcmp.gt.s32.totalorder %v973, 0
    %v975 = vsel %vm974, %v973, 0
    %v976 = vshrl.u32 %v975, 5
    %v977 = vand.u32 %v975, 31
    %v978 = vsub.s32 32, %v977
    %v979 = vshrl.u32 683565275, %v978
    %v980 = vshll.u32 683565275, %v977
    %v981 = vshrl.u32 2475754826, %v978
    %v982 = vor.u32 %v980, %v981
    %v983 = vshll.u32 2475754826, %v977
    %v984 = vshrl.u32 2131351028, %v978
    %v985 = vor.u32 %v983, %v984
    %v986 = vshll.u32 2131351028, %v977
    %v987 = vshrl.u32 2102212464, %v978
    %v988 = vor.u32 %v986, %v987
    %v989 = vshll.u32 2102212464, %v977
    %v990 = vshrl.u32 920167782, %v978
    %v991 = vor.u32 %v989, %v990
    %v992 = vshll.u32 920167782, %v977
    %v993 = vshrl.u32 1326507024, %v978
    %v994 = vor.u32 %v992, %v993
    %vm995 = vcmp.lt.s32.totalorder %v976, 1
    %vm996 = vcmp.lt.s32.totalorder %v976, 2
    %vm997 = vcmp.lt.s32.totalorder %v976, 3
    %vm998 = vcmp.lt.s32.totalorder %v976, 4
    %v999 = vsel %vm995, %v979, %v982
    %v1000 = vsel %vm998, %v988, 2102212464
    %v1001 = vsel %vm997, %v985, %v1000
    %v1002 = vsel %vm996, %v999, %v1001
    %v1003 = vsel %vm995, %v982, %v985
    %v1004 = vsel %vm998, %v991, 920167782
    %v1005 = vsel %vm997, %v988, %v1004
    %v1006 = vsel %vm996, %v1003, %v1005
    %v1007 = vsel %vm995, %v985, %v988
    %v1008 = vsel %vm998, %v994, 1326507024
    %v1009 = vsel %vm997, %v991, %v1008
    %v1010 = vsel %vm996, %v1007, %v1009
    %v1011 = vshll.u32 %v971, 8
    %v1012 = vmul.u32.u64.compose %v1011, %v1010
    %v1013 = vextract.low.u32 %v1012
    %v1014 = vextract.high.u32 %v1012
    %v1015 = vmul.u32.u64.compose %v1011, %v1006
    %v1016 = vextract.low.u32 %v1015
    %v1017 = vextract.high.u32 %v1015
    %v1018 = vmul.u32 %v1011, %v1002
    %v1019 = vadd.s32 %v1014, %v1016
    %vm1020 = vc.u32 %v1014, %v1016
    %v1021 = vadd.s32 %v1017, 1
    %v1022 = vsel %vm1020, %v1021, %v1017
    %v1023 = vadd.s32 %v1018, %v1022
    %v1024 = vadd.s32 %v1023, 536870912
    %v1025 = vshrl.u32 %v1024, 30
    %v1026 = vshll.u32 %v1025, 30
    %v1027 = vsub.s32 %v1023, %v1026
    %vm1028 = vcmp.lt.s32.totalorder %v1027, 0
    %v1029 = vsub.s32 0, %v1027
    %v1030 = vsel %vm1028, %v1029, %v1027
    %v1031 = vclz %v1030
    %v1032 = vsub.s32 %v1031, 2
    %vm1033 = vcmp.gt.s32.totalorder 0, %v1032
    %v1034 = vsel %vm1033, 0, %v1032
    %v1035 = vsub.s32 32, %v1034
    %v1036 = vshll.u32 %v1027, %v1034
    %v1037 = vshrl.u32 %v1019, %v1035
    %v1038 = vor.u32 %v1036, %v1037
    %v1039 = vsub.s32 4294967266, %v1034
    %v1040 = vadd.s32 %v1039, 127
    %v1041 = vshll.u32 %v1040, 23
    %v1042 = vor.u32 4788187, %v1041
    %v1043 = vand.u32 2147483647, %v1042
    %v1045 = vcvt.s32.f32 %v1038
    %v1046 = vmul.f32 %v1045, %v1043
    %v1047 = vxor.u32 %v1046, 2147483648
    %v1048 = vsel %vm965, %v1047, %v1046
    %v1049 = vsub.s32 4, %v1025
    %v1050 = vsel %vm965, %v1049, %v1025
    %v1051 = vsel %vm964, %v651, %v1048
    %v1052 = vsel %vm964, 0, %v1050
    %v1053 = vcosq.f32.pop %v1051
    %v1054 = vsinq.f32.pop %v1051
    %vm1055 = vweird.f32 %v651
    %v1056 = vand.u32 %v1052, 3
    %vm1057 = vcmp.lt.s32.totalorder %v1056, 2
    %vm1058 = vcmp.eq.s32.totalorder %v1056, 0
    %v1059 = vxor.u32 %v1054, 2147483648
    %v1060 = vsel %vm1058, %v1053, %v1059
    %vm1061 = vcmp.eq.s32.totalorder %v1056, 2
    %v1062 = vxor.u32 %v1053, 2147483648
    %v1063 = vsel %vm1061, %v1062, %v1054
    %v1064 = vsel %vm1057, %v1060, %v1063
    %v1065 = vsel %vm1055, nan, %v1064
    %v1066 = vand.u32 2147483647, %v636
    %vm1067 = vcmp.le.f32.partialorder %v1066, 0.7853982
    %vm1068 = vcmp.lt.s32.totalorder %v636, 0
    %v1069 = vand.u32 %v636, 2139095040
    %v1070 = vshrl.u32 %v1069, 23
    %v1071 = vsub.s32 %v1070, 127
    %v1072 = vand.u32 2147483647, %v636
    %v1073 = vand.u32 %v1072, 8388607
    %v1074 = vor.u32 %v1073, 8388608
    %v1075 = vsub.s32 0, %v1074
    %v1076 = vadd.s32 %v1071, 1
    %vm1077 = vcmp.gt.s32.totalorder %v1076, 0
    %v1078 = vsel %vm1077, %v1076, 0
    %v1079 = vshrl.u32 %v1078, 5
    %v1080 = vand.u32 %v1078, 31
    %v1081 = vsub.s32 32, %v1080
    %v1082 = vshrl.u32 683565275, %v1081
    %v1083 = vshll.u32 683565275, %v1080
    %v1084 = vshrl.u32 2475754826, %v1081
    %v1085 = vor.u32 %v1083, %v1084
    %v1086 = vshll.u32 2475754826, %v1080
    %v1087 = vshrl.u32 2131351028, %v1081
    %v1088 = vor.u32 %v1086, %v1087
    %v1089 = vshll.u32 2131351028, %v1080
    %v1090 = vshrl.u32 2102212464, %v1081
    %v1091 = vor.u32 %v1089, %v1090
    %v1092 = vshll.u32 2102212464, %v1080
    %v1093 = vshrl.u32 920167782, %v1081
    %v1094 = vor.u32 %v1092, %v1093
    %v1095 = vshll.u32 920167782, %v1080
    %v1096 = vshrl.u32 1326507024, %v1081
    %v1097 = vor.u32 %v1095, %v1096
    %vm1098 = vcmp.lt.s32.totalorder %v1079, 1
    %vm1099 = vcmp.lt.s32.totalorder %v1079, 2
    %vm1100 = vcmp.lt.s32.totalorder %v1079, 3
    %vm1101 = vcmp.lt.s32.totalorder %v1079, 4
    %v1102 = vsel %vm1098, %v1082, %v1085
    %v1103 = vsel %vm1101, %v1091, 2102212464
    %v1104 = vsel %vm1100, %v1088, %v1103
    %v1105 = vsel %vm1099, %v1102, %v1104
    %v1106 = vsel %vm1098, %v1085, %v1088
    %v1107 = vsel %vm1101, %v1094, 920167782
    %v1108 = vsel %vm1100, %v1091, %v1107
    %v1109 = vsel %vm1099, %v1106, %v1108
    %v1110 = vsel %vm1098, %v1088, %v1091
    %v1111 = vsel %vm1101, %v1097, 1326507024
    %v1112 = vsel %vm1100, %v1094, %v1111
    %v1113 = vsel %vm1099, %v1110, %v1112
    %v1114 = vshll.u32 %v1074, 8
    %v1115 = vmul.u32.u64.compose %v1114, %v1113
    %v1116 = vextract.low.u32 %v1115
    %v1117 = vextract.high.u32 %v1115
    %v1118 = vmul.u32.u64.compose %v1114, %v1109
    %v1119 = vextract.low.u32 %v1118
    %v1120 = vextract.high.u32 %v1118
    %v1121 = vmul.u32 %v1114, %v1105
    %v1122 = vadd.s32 %v1117, %v1119
    %vm1123 = vc.u32 %v1117, %v1119
    %v1124 = vadd.s32 %v1120, 1
    %v1125 = vsel %vm1123, %v1124, %v1120
    %v1126 = vadd.s32 %v1121, %v1125
    %v1127 = vadd.s32 %v1126, 536870912
    %v1128 = vshrl.u32 %v1127, 30
    %v1129 = vshll.u32 %v1128, 30
    %v1130 = vsub.s32 %v1126, %v1129
    %vm1131 = vcmp.lt.s32.totalorder %v1130, 0
    %v1132 = vsub.s32 0, %v1130
    %v1133 = vsel %vm1131, %v1132, %v1130
    %v1134 = vclz %v1133
    %v1135 = vsub.s32 %v1134, 2
    %vm1136 = vcmp.gt.s32.totalorder 0, %v1135
    %v1137 = vsel %vm1136, 0, %v1135
    %v1138 = vsub.s32 32, %v1137
    %v1139 = vshll.u32 %v1130, %v1137
    %v1140 = vshrl.u32 %v1122, %v1138
    %v1141 = vor.u32 %v1139, %v1140
    %v1142 = vsub.s32 4294967266, %v1137
    %v1143 = vadd.s32 %v1142, 127
    %v1144 = vshll.u32 %v1143, 23
    %v1145 = vor.u32 4788187, %v1144
    %v1146 = vand.u32 2147483647, %v1145
    %v1148 = vcvt.s32.f32 %v1141
    %v1149 = vmul.f32 %v1148, %v1146
    %v1150 = vxor.u32 %v1149, 2147483648
    %v1151 = vsel %vm1068, %v1150, %v1149
    %v1152 = vsub.s32 4, %v1128
    %v1153 = vsel %vm1068, %v1152, %v1128
    %v1154 = vsel %vm1067, %v636, %v1151
    %v1155 = vsel %vm1067, 0, %v1153
    %v1156 = vcosq.f32.pop %v1154
    %v1157 = vsinq.f32.pop %v1154
    %vm1158 = vweird.f32 %v636
    %v1159 = vadd.s32 %v1155, 3
    %v1160 = vand.u32 %v1159, 3
    %vm1161 = vcmp.lt.s32.totalorder %v1160, 2
    %vm1162 = vcmp.eq.s32.totalorder %v1160, 0
    %v1163 = vxor.u32 %v1157, 2147483648
    %v1164 = vsel %vm1162, %v1156, %v1163
    %vm1165 = vcmp.eq.s32.totalorder %v1160, 2
    %v1166 = vxor.u32 %v1156, 2147483648
    %v1167 = vsel %vm1165, %v1166, %v1157
    %v1168 = vsel %vm1161, %v1164, %v1167
    %v1169 = vsel %vm1158, nan, %v1168
    %v1170 = vand.u32 2147483647, %v641
    %vm1171 = vcmp.le.f32.partialorder %v1170, 0.7853982
    %vm1172 = vcmp.lt.s32.totalorder %v641, 0
    %v1173 = vand.u32 %v641, 2139095040
    %v1174 = vshrl.u32 %v1173, 23
    %v1175 = vsub.s32 %v1174, 127
    %v1176 = vand.u32 2147483647, %v641
    %v1177 = vand.u32 %v1176, 8388607
    %v1178 = vor.u32 %v1177, 8388608
    %v1179 = vsub.s32 0, %v1178
    %v1180 = vadd.s32 %v1175, 1
    %vm1181 = vcmp.gt.s32.totalorder %v1180, 0
    %v1182 = vsel %vm1181, %v1180, 0
    %v1183 = vshrl.u32 %v1182, 5
    %v1184 = vand.u32 %v1182, 31
    %v1185 = vsub.s32 32, %v1184
    %v1186 = vshrl.u32 683565275, %v1185
    %v1187 = vshll.u32 683565275, %v1184
    %v1188 = vshrl.u32 2475754826, %v1185
    %v1189 = vor.u32 %v1187, %v1188
    %v1190 = vshll.u32 2475754826, %v1184
    %v1191 = vshrl.u32 2131351028, %v1185
    %v1192 = vor.u32 %v1190, %v1191
    %v1193 = vshll.u32 2131351028, %v1184
    %v1194 = vshrl.u32 2102212464, %v1185
    %v1195 = vor.u32 %v1193, %v1194
    %v1196 = vshll.u32 2102212464, %v1184
    %v1197 = vshrl.u32 920167782, %v1185
    %v1198 = vor.u32 %v1196, %v1197
    %v1199 = vshll.u32 920167782, %v1184
    %v1200 = vshrl.u32 1326507024, %v1185
    %v1201 = vor.u32 %v1199, %v1200
    %vm1202 = vcmp.lt.s32.totalorder %v1183, 1
    %vm1203 = vcmp.lt.s32.totalorder %v1183, 2
    %vm1204 = vcmp.lt.s32.totalorder %v1183, 3
    %vm1205 = vcmp.lt.s32.totalorder %v1183, 4
    %v1206 = vsel %vm1202, %v1186, %v1189
    %v1207 = vsel %vm1205, %v1195, 2102212464
    %v1208 = vsel %vm1204, %v1192, %v1207
    %v1209 = vsel %vm1203, %v1206, %v1208
    %v1210 = vsel %vm1202, %v1189, %v1192
    %v1211 = vsel %vm1205, %v1198, 920167782
    %v1212 = vsel %vm1204, %v1195, %v1211
    %v1213 = vsel %vm1203, %v1210, %v1212
    %v1214 = vsel %vm1202, %v1192, %v1195
    %v1215 = vsel %vm1205, %v1201, 1326507024
    %v1216 = vsel %vm1204, %v1198, %v1215
    %v1217 = vsel %vm1203, %v1214, %v1216
    %v1218 = vshll.u32 %v1178, 8
    %v1219 = vmul.u32.u64.compose %v1218, %v1217
    %v1220 = vextract.low.u32 %v1219
    %v1221 = vextract.high.u32 %v1219
    %v1222 = vmul.u32.u64.compose %v1218, %v1213
    %v1223 = vextract.low.u32 %v1222
    %v1224 = vextract.high.u32 %v1222
    %v1225 = vmul.u32 %v1218, %v1209
    %v1226 = vadd.s32 %v1221, %v1223
    %vm1227 = vc.u32 %v1221, %v1223
    %v1228 = vadd.s32 %v1224, 1
    %v1229 = vsel %vm1227, %v1228, %v1224
    %v1230 = vadd.s32 %v1225, %v1229
    %v1231 = vadd.s32 %v1230, 536870912
    %v1232 = vshrl.u32 %v1231, 30
    %v1233 = vshll.u32 %v1232, 30
    %v1234 = vsub.s32 %v1230, %v1233
    %vm1235 = vcmp.lt.s32.totalorder %v1234, 0
    %v1236 = vsub.s32 0, %v1234
    %v1237 = vsel %vm1235, %v1236, %v1234
    %v1238 = vclz %v1237
    %v1239 = vsub.s32 %v1238, 2
    %vm1240 = vcmp.gt.s32.totalorder 0, %v1239
    %v1241 = vsel %vm1240, 0, %v1239
    %v1242 = vsub.s32 32, %v1241
    %v1243 = vshll.u32 %v1234, %v1241
    %v1244 = vshrl.u32 %v1226, %v1242
    %v1245 = vor.u32 %v1243, %v1244
    %v1246 = vsub.s32 4294967266, %v1241
    %v1247 = vadd.s32 %v1246, 127
    %v1248 = vshll.u32 %v1247, 23
    %v1249 = vor.u32 4788187, %v1248
    %v1250 = vand.u32 2147483647, %v1249
    %v1252 = vcvt.s32.f32 %v1245
    %v1253 = vmul.f32 %v1252, %v1250
    %v1254 = vxor.u32 %v1253, 2147483648
    %v1255 = vsel %vm1172, %v1254, %v1253
    %v1256 = vsub.s32 4, %v1232
    %v1257 = vsel %vm1172, %v1256, %v1232
    %v1258 = vsel %vm1171, %v641, %v1255
    %v1259 = vsel %vm1171, 0, %v1257
    %v1260 = vcosq.f32.pop %v1258
    %v1261 = vsinq.f32.pop %v1258
    %vm1262 = vweird.f32 %v641
    %v1263 = vadd.s32 %v1259, 3
    %v1264 = vand.u32 %v1263, 3
    %vm1265 = vcmp.lt.s32.totalorder %v1264, 2
    %vm1266 = vcmp.eq.s32.totalorder %v1264, 0
    %v1267 = vxor.u32 %v1261, 2147483648
    %v1268 = vsel %vm1266, %v1260, %v1267
    %vm1269 = vcmp.eq.s32.totalorder %v1264, 2
    %v1270 = vxor.u32 %v1260, 2147483648
    %v1271 = vsel %vm1269, %v1270, %v1261
    %v1272 = vsel %vm1265, %v1268, %v1271
    %v1273 = vsel %vm1262, nan, %v1272
    %v1274 = vand.u32 2147483647, %v646
    %vm1275 = vcmp.le.f32.partialorder %v1274, 0.7853982
    %vm1276 = vcmp.lt.s32.totalorder %v646, 0
    %v1277 = vand.u32 %v646, 2139095040
    %v1278 = vshrl.u32 %v1277, 23
    %v1279 = vsub.s32 %v1278, 127
    %v1280 = vand.u32 2147483647, %v646
    %v1281 = vand.u32 %v1280, 8388607
    %v1282 = vor.u32 %v1281, 8388608
    %v1283 = vsub.s32 0, %v1282
    %v1284 = vadd.s32 %v1279, 1
    %vm1285 = vcmp.gt.s32.totalorder %v1284, 0
    %v1286 = vsel %vm1285, %v1284, 0
    %v1287 = vshrl.u32 %v1286, 5
    %v1288 = vand.u32 %v1286, 31
    %v1289 = vsub.s32 32, %v1288
    %v1290 = vshrl.u32 683565275, %v1289
    %v1291 = vshll.u32 683565275, %v1288
    %v1292 = vshrl.u32 2475754826, %v1289
    %v1293 = vor.u32 %v1291, %v1292
    %v1294 = vshll.u32 2475754826, %v1288
    %v1295 = vshrl.u32 2131351028, %v1289
    %v1296 = vor.u32 %v1294, %v1295
    %v1297 = vshll.u32 2131351028, %v1288
    %v1298 = vshrl.u32 2102212464, %v1289
    %v1299 = vor.u32 %v1297, %v1298
    %v1300 = vshll.u32 2102212464, %v1288
    %v1301 = vshrl.u32 920167782, %v1289
    %v1302 = vor.u32 %v1300, %v1301
    %v1303 = vshll.u32 920167782, %v1288
    %v1304 = vshrl.u32 1326507024, %v1289
    %v1305 = vor.u32 %v1303, %v1304
    %vm1306 = vcmp.lt.s32.totalorder %v1287, 1
    %vm1307 = vcmp.lt.s32.totalorder %v1287, 2
    %vm1308 = vcmp.lt.s32.totalorder %v1287, 3
    %vm1309 = vcmp.lt.s32.totalorder %v1287, 4
    %v1310 = vsel %vm1306, %v1290, %v1293
    %v1311 = vsel %vm1309, %v1299, 2102212464
    %v1312 = vsel %vm1308, %v1296, %v1311
    %v1313 = vsel %vm1307, %v1310, %v1312
    %v1314 = vsel %vm1306, %v1293, %v1296
    %v1315 = vsel %vm1309, %v1302, 920167782
    %v1316 = vsel %vm1308, %v1299, %v1315
    %v1317 = vsel %vm1307, %v1314, %v1316
    %v1318 = vsel %vm1306, %v1296, %v1299
    %v1319 = vsel %vm1309, %v1305, 1326507024
    %v1320 = vsel %vm1308, %v1302, %v1319
    %v1321 = vsel %vm1307, %v1318, %v1320
    %v1322 = vshll.u32 %v1282, 8
    %v1323 = vmul.u32.u64.compose %v1322, %v1321
    %v1324 = vextract.low.u32 %v1323
    %v1325 = vextract.high.u32 %v1323
    %v1326 = vmul.u32.u64.compose %v1322, %v1317
    %v1327 = vextract.low.u32 %v1326
    %v1328 = vextract.high.u32 %v1326
    %v1329 = vmul.u32 %v1322, %v1313
    %v1330 = vadd.s32 %v1325, %v1327
    %vm1331 = vc.u32 %v1325, %v1327
    %v1332 = vadd.s32 %v1328, 1
    %v1333 = vsel %vm1331, %v1332, %v1328
    %v1334 = vadd.s32 %v1329, %v1333
    %v1335 = vadd.s32 %v1334, 536870912
    %v1336 = vshrl.u32 %v1335, 30
    %v1337 = vshll.u32 %v1336, 30
    %v1338 = vsub.s32 %v1334, %v1337
    %vm1339 = vcmp.lt.s32.totalorder %v1338, 0
    %v1340 = vsub.s32 0, %v1338
    %v1341 = vsel %vm1339, %v1340, %v1338
    %v1342 = vclz %v1341
    %v1343 = vsub.s32 %v1342, 2
    %vm1344 = vcmp.gt.s32.totalorder 0, %v1343
    %v1345 = vsel %vm1344, 0, %v1343
    %v1346 = vsub.s32 32, %v1345
    %v1347 = vshll.u32 %v1338, %v1345
    %v1348 = vshrl.u32 %v1330, %v1346
    %v1349 = vor.u32 %v1347, %v1348
    %v1350 = vsub.s32 4294967266, %v1345
    %v1351 = vadd.s32 %v1350, 127
    %v1352 = vshll.u32 %v1351, 23
    %v1353 = vor.u32 4788187, %v1352
    %v1354 = vand.u32 2147483647, %v1353
    %v1356 = vcvt.s32.f32 %v1349
    %v1357 = vmul.f32 %v1356, %v1354
    %v1358 = vxor.u32 %v1357, 2147483648
    %v1359 = vsel %vm1276, %v1358, %v1357
    %v1360 = vsub.s32 4, %v1336
    %v1361 = vsel %vm1276, %v1360, %v1336
    %v1362 = vsel %vm1275, %v646, %v1359
    %v1363 = vsel %vm1275, 0, %v1361
    %v1364 = vcosq.f32.pop %v1362
    %v1365 = vsinq.f32.pop %v1362
    %vm1366 = vweird.f32 %v646
    %v1367 = vadd.s32 %v1363, 3
    %v1368 = vand.u32 %v1367, 3
    %vm1369 = vcmp.lt.s32.totalorder %v1368, 2
    %vm1370 = vcmp.eq.s32.totalorder %v1368, 0
    %v1371 = vxor.u32 %v1365, 2147483648
    %v1372 = vsel %vm1370, %v1364, %v1371
    %vm1373 = vcmp.eq.s32.totalorder %v1368, 2
    %v1374 = vxor.u32 %v1364, 2147483648
    %v1375 = vsel %vm1373, %v1374, %v1365
    %v1376 = vsel %vm1369, %v1372, %v1375
    %v1377 = vsel %vm1366, nan, %v1376
    %v1378 = vand.u32 2147483647, %v651
    %vm1379 = vcmp.le.f32.partialorder %v1378, 0.7853982
    %vm1380 = vcmp.lt.s32.totalorder %v651, 0
    %v1381 = vand.u32 %v651, 2139095040
    %v1382 = vshrl.u32 %v1381, 23
    %v1383 = vsub.s32 %v1382, 127
    %v1384 = vand.u32 2147483647, %v651
    %v1385 = vand.u32 %v1384, 8388607
    %v1386 = vor.u32 %v1385, 8388608
    %v1387 = vsub.s32 0, %v1386
    %v1388 = vadd.s32 %v1383, 1
    %vm1389 = vcmp.gt.s32.totalorder %v1388, 0
    %v1390 = vsel %vm1389, %v1388, 0
    %v1391 = vshrl.u32 %v1390, 5
    %v1392 = vand.u32 %v1390, 31
    %v1393 = vsub.s32 32, %v1392
    %v1394 = vshrl.u32 683565275, %v1393
    %v1395 = vshll.u32 683565275, %v1392
    %v1396 = vshrl.u32 2475754826, %v1393
    %v1397 = vor.u32 %v1395, %v1396
    %v1398 = vshll.u32 2475754826, %v1392
    %v1399 = vshrl.u32 2131351028, %v1393
    %v1400 = vor.u32 %v1398, %v1399
    %v1401 = vshll.u32 2131351028, %v1392
    %v1402 = vshrl.u32 2102212464, %v1393
    %v1403 = vor.u32 %v1401, %v1402
    %v1404 = vshll.u32 2102212464, %v1392
    %v1405 = vshrl.u32 920167782, %v1393
    %v1406 = vor.u32 %v1404, %v1405
    %v1407 = vshll.u32 920167782, %v1392
    %v1408 = vshrl.u32 1326507024, %v1393
    %v1409 = vor.u32 %v1407, %v1408
    %vm1410 = vcmp.lt.s32.totalorder %v1391, 1
    %vm1411 = vcmp.lt.s32.totalorder %v1391, 2
    %vm1412 = vcmp.lt.s32.totalorder %v1391, 3
    %vm1413 = vcmp.lt.s32.totalorder %v1391, 4
    %v1414 = vsel %vm1410, %v1394, %v1397
    %v1415 = vsel %vm1413, %v1403, 2102212464
    %v1416 = vsel %vm1412, %v1400, %v1415
    %v1417 = vsel %vm1411, %v1414, %v1416
    %v1418 = vsel %vm1410, %v1397, %v1400
    %v1419 = vsel %vm1413, %v1406, 920167782
    %v1420 = vsel %vm1412, %v1403, %v1419
    %v1421 = vsel %vm1411, %v1418, %v1420
    %v1422 = vsel %vm1410, %v1400, %v1403
    %v1423 = vsel %vm1413, %v1409, 1326507024
    %v1424 = vsel %vm1412, %v1406, %v1423
    %v1425 = vsel %vm1411, %v1422, %v1424
    %v1426 = vshll.u32 %v1386, 8
    %v1427 = vmul.u32.u64.compose %v1426, %v1425
    %v1428 = vextract.low.u32 %v1427
    %v1429 = vextract.high.u32 %v1427
    %v1430 = vmul.u32.u64.compose %v1426, %v1421
    %v1431 = vextract.low.u32 %v1430
    %v1432 = vextract.high.u32 %v1430
    %v1433 = vmul.u32 %v1426, %v1417
    %v1434 = vadd.s32 %v1429, %v1431
    %vm1435 = vc.u32 %v1429, %v1431
    %v1436 = vadd.s32 %v1432, 1
    %v1437 = vsel %vm1435, %v1436, %v1432
    %v1438 = vadd.s32 %v1433, %v1437
    %v1439 = vadd.s32 %v1438, 536870912
    %v1440 = vshrl.u32 %v1439, 30
    %v1441 = vshll.u32 %v1440, 30
    %v1442 = vsub.s32 %v1438, %v1441
    %vm1443 = vcmp.lt.s32.totalorder %v1442, 0
    %v1444 = vsub.s32 0, %v1442
    %v1445 = vsel %vm1443, %v1444, %v1442
    %v1446 = vclz %v1445
    %v1447 = vsub.s32 %v1446, 2
    %vm1448 = vcmp.gt.s32.totalorder 0, %v1447
    %v1449 = vsel %vm1448, 0, %v1447
    %v1450 = vsub.s32 32, %v1449
    %v1451 = vshll.u32 %v1442, %v1449
    %v1452 = vshrl.u32 %v1434, %v1450
    %v1453 = vor.u32 %v1451, %v1452
    %v1454 = vsub.s32 4294967266, %v1449
    %v1455 = vadd.s32 %v1454, 127
    %v1456 = vshll.u32 %v1455, 23
    %v1457 = vor.u32 4788187, %v1456
    %v1458 = vand.u32 2147483647, %v1457
    %v1460 = vcvt.s32.f32 %v1453
    %v1461 = vmul.f32 %v1460, %v1458
    %v1462 = vxor.u32 %v1461, 2147483648
    %v1463 = vsel %vm1380, %v1462, %v1461
    %v1464 = vsub.s32 4, %v1440
    %v1465 = vsel %vm1380, %v1464, %v1440
    %v1466 = vsel %vm1379, %v651, %v1463
    %v1467 = vsel %vm1379, 0, %v1465
    %v1468 = vcosq.f32.pop %v1466
    %v1469 = vsinq.f32.pop %v1466
    %vm1470 = vweird.f32 %v651
    %v1471 = vadd.s32 %v1467, 3
    %v1472 = vand.u32 %v1471, 3
    %vm1473 = vcmp.lt.s32.totalorder %v1472, 2
    %vm1474 = vcmp.eq.s32.totalorder %v1472, 0
    %v1475 = vxor.u32 %v1469, 2147483648
    %v1476 = vsel %vm1474, %v1468, %v1475
    %vm1477 = vcmp.eq.s32.totalorder %v1472, 2
    %v1478 = vxor.u32 %v1468, 2147483648
    %v1479 = vsel %vm1477, %v1478, %v1469
    %v1480 = vsel %vm1473, %v1476, %v1479
    %v1481 = vsel %vm1470, nan, %v1480
    %vm1482 = vcmask 523264
    %v1483 = vsel %vm1482, %v756, 0.0
    %v1484 = vsel %vm1482, %v859, 0.0
    %v1485 = vadd.f32 %v1483, %v1484
    %v1486 = vrot.slane %v1485, 4
    %v1487 = vadd.f32 %v1485, %v1486
    %v1488 = vrot.slane %v1487, 2
    %v1489 = vadd.f32 %v1487, %v1488
    %v1490 = vrot.slane %v1489, 1
    %v1491 = vadd.f32 %v1489, %v1490
    %v1492 = vsel %vm1482, %v1169, 0.0
    %v1493 = vsel %vm1482, %v1273, 0.0
    %v1494 = vadd.f32 %v1492, %v1493
    %v1495 = vrot.slane %v1494, 4
    %v1496 = vadd.f32 %v1494, %v1495
    %v1497 = vrot.slane %v1496, 2
    %v1498 = vadd.f32 %v1496, %v1497
    %v1499 = vrot.slane %v1498, 1
    %v1500 = vadd.f32 %v1498, %v1499
    %v1501 = vsel %vm1482, %v962, 0.0
    %v1502 = vsel %vm1482, %v1065, 0.0
    %v1503 = vadd.f32 %v1501, %v1502
    %v1504 = vrot.slane %v1503, 4
    %v1505 = vadd.f32 %v1503, %v1504
    %v1506 = vrot.slane %v1505, 2
    %v1507 = vadd.f32 %v1505, %v1506
    %v1508 = vrot.slane %v1507, 1
    %v1509 = vadd.f32 %v1507, %v1508
    %v1510 = vsel %vm1482, %v1377, 0.0
    %v1511 = vsel %vm1482, %v1481, 0.0
    %v1512 = vadd.f32 %v1510, %v1511
    %v1513 = vrot.slane %v1512, 4
    %v1514 = vadd.f32 %v1512, %v1513
    %v1515 = vrot.slane %v1514, 2
    %v1516 = vadd.f32 %v1514, %v1515
    %v1517 = vrot.slane %v1516, 1
    %v1518 = vadd.f32 %v1516, %v1517
    %v1519 = vmul.f32 %v1491, %v1491
    %v1520 = vmul.f32 %v1500, %v1500
    %v1521 = vadd.f32 %v1519, %v1520
    %v1522 = vrsqrt.pop %v1521
    %v1523 = vmul.f32 %v1521, %v1522
    %vm1524 = vcmp.eq.f32.partialorder %v1521, inf
    %v1525 = vsel %vm1524, %v1521, %v1523
    %vm1526 = vcmp.eq.f32.partialorder %v1521, 0.0
    %v1527 = vand.u32 %v1521, 2147483648
    %v1528 = vsel %vm1526, %v1527, %v1525
    %v1529 = vmul.f32 %v1509, %v1509
    %v1530 = vmul.f32 %v1518, %v1518
    %v1531 = vadd.f32 %v1529, %v1530
    %v1532 = vrsqrt.pop %v1531
    %v1533 = vmul.f32 %v1531, %v1532
    %vm1534 = vcmp.eq.f32.partialorder %v1531, inf
    %v1535 = vsel %vm1534, %v1531, %v1533
    %vm1536 = vcmp.eq.f32.partialorder %v1531, 0.0
    %v1537 = vand.u32 %v1531, 2147483648
    %v1538 = vsel %vm1536, %v1537, %v1535
    %v1539 = vsub.f32 %v1538, %v1528
    %v1540 = vmul.f32 %v1539, %v1539
    %v1541 = vmul.f32 %v1538, %v1528
    %v1542 = vmul.f32 %v1491, %v1509
    %v1543 = vsub.f32 %v1541, %v1542
    %v1544 = vmul.f32 %v1500, %v1518
    %v1545 = vsub.f32 %v1543, %v1544
    %v1546 = vmul.f32 %v1545, 2.0
    %v1547 = vmax.f32 %v1546, 2.56e-10
    %v1548 = vmul.f32 %v1540, 0.5
    %v1549 = vmul.f32 %v1547, 0.5
    %v1550 = vadd.f32 %v1548, %v1549
    %v1551 = vrsqrt.pop %v1550
    %v1552 = vmul.f32 %v1550, %v1551
    %vm1553 = vcmp.eq.f32.partialorder %v1550, inf
    %v1554 = vsel %vm1553, %v1550, %v1552
    %vm1555 = vcmp.eq.f32.partialorder %v1550, 0.0
    %v1556 = vand.u32 %v1550, 2147483648
    %v1557 = vsel %vm1555, %v1556, %v1554
    %vm1558 = vcmask 516096
    %v1559 = vsel %vm1558, %v1557, 0.0
    %1560 = vadd.xlane.f32.xlu0 %v1559
    %v1561 = vpop.xlane.xlu0 %1560
    %v1562 = vrot.slane %v1561, 4
    %v1563 = vadd.f32 %v1561, %v1562
    %v1564 = vrot.slane %v1563, 2
    %v1565 = vadd.f32 %v1563, %v1564
    %v1566 = vrot.slane %v1565, 1
    %v1567 = vadd.f32 %v1565, %v1566
    %s1568 = vtos %v1567
    %v1569 = vstv %s1568
    %v1570 = vrcp.pop 64.0
    %v1571 = vmul.f32 %v1569, %v1570
    %v1572 = vmul.f32 %v1571, 0.0625
    %vm1573 = vcmask 0
    %1574 = vst.msk [vmem:[#allocation11] sm:$0x1] %vm1573, %v1572
    // Predicated region
    $region54: #{tpu_custom_call.1} parent=1 // pred_check
      _
    $region55: #{tpu_custom_call.1} parent=1 // pred_check_branch
      %1576 = sbr.rel (0) target = $region57
    $region56: #{tpu_custom_call.1} parent=1 // pred_region
      %s1578 = ssub.s32 16, 16
      %1579 = vsyncadd [#allocation4], %s1578
      %s1581 = sshll.u32 [#allocation11], 4
      %s1582 = int_to_ptr.vmem [resolvable:$true] %s1581
      %1584 = dma.vmem_to_hbm [thread:$0]  %s1582, 16, %s8, [#allocation4]
    $region57: #{tpu_custom_call.1} parent=1 // pred_fallthru
      _
    // Predicated region
    $region58: #{tpu_custom_call.1} parent=1 // pred_check
      _
    $region59: #{tpu_custom_call.1} parent=1 // pred_check_branch
      %1586 = sbr.rel (0) target = $region61
    $region60: #{tpu_custom_call.1} parent=1 // pred_region
      %s1588 = ssub.s32 1024, 1024
      %1589 = vsyncadd [#allocation13], %s1588
      %s1590 = sshll.u32 [#allocation12], 4
      %s1591 = int_to_ptr.vmem [resolvable:$true] %s1590
      %1596 = dma.vmem_to_hbm [thread:$0]  %s1591, 1024, %s9, [#allocation13], 128, 128, 8
    $region61: #{tpu_custom_call.1} parent=1 // pred_fallthru
      _
    // Predicated region
    $region62: #{tpu_custom_call.1} parent=1 // pred_check
      _
    $region63: #{tpu_custom_call.1} parent=1 // pred_check_branch
      %1598 = sbr.rel (0) target = $region65
    $region64: #{tpu_custom_call.1} parent=1 // pred_region
      %1599 = dma.done [#allocation4], 16
    $region65: #{tpu_custom_call.1} parent=1 // pred_fallthru
      _
    // Predicated region
    $region66: #{tpu_custom_call.1} parent=1 // pred_check
      _
    $region67: #{tpu_custom_call.1} parent=1 // pred_check_branch
      %1601 = sbr.rel (0) target = $region69
    $region68: #{tpu_custom_call.1} parent=1 // pred_region
      %1602 = dma.done [#allocation13], 1024
    $region69: #{tpu_custom_call.1} parent=1 // pred_fallthru
      _
    %1603 = vsyncpa [#allocation3], 1
    %1604 = vsyncpa [#allocation6], 1
    %1605 = vsyncpa [#allocation9], 1
    %1606 = vsyncpa [#allocation4], 1
    %1607 = vsyncpa [#allocation13], 1

</llo_original>
